<compile_context>
chip_gen: v5e
topology: v5e:2x2
jax: 0.10.0
libtpu: 0.0.40
codegen_flags: <defaults>
</compile_context>

<pallas_src>
import math

import jax
import jax.numpy as jnp
from jax.experimental import pallas as pl
from jax.experimental.pallas import tpu as pltpu

# ---- small synthetic CLIP-text config (real CLIP: S=77->128, D=512/768, L=12)
B = 2             # batch
S = 7             # logical max_length (toy stand-in for 77)
S_PAD = 8         # padded sequence (sublane aligned; real CLIP pads 77 -> 128)
D = 32            # hidden size (toy)
H = 4             # attention heads
DH = D // H       # head dim
L = 2             # transformer layers (toy)
M = 4 * D         # MLP intermediate
TB = 1            # batch tile per grid step (leading "parallel" axis)
VOCAB = 64
LN_EPS = 1e-5
NEG_INF = -1e9    # additive causal-mask constant (scores accumulate in f32)


# --------------------------- shared per-layer math ---------------------------
# Pure-jnp functions used both inside the Pallas kernel (traced by Mosaic) and
# by the plain-JAX reference, so kernel vs reference differ only in lowering
# (MXU dots, EUP approx reciprocal), not in the math.

def layer_norm(h, g, b):
    # LayerNorm statistics in f32 (v5e has no bf16 VPU/EUP).
    mu = jnp.mean(h, axis=-1, keepdims=True)
    var = jnp.mean(jnp.square(h - mu), axis=-1, keepdims=True)
    return (h - mu) * jax.lax.rsqrt(var + LN_EPS) * g + b


def mm(a, w):
    # bf16 operands on the MXU, f32 accumulation.
    return jnp.dot(a.astype(jnp.bfloat16), w.astype(jnp.bfloat16),
                   preferred_element_type=jnp.float32)


def clip_layer(x, mask, ln1_g, ln1_b, wqkv, bqkv, wo_h, bo,
               ln2_g, ln2_b, w1, b1, w2, b2, nb, ns, recip):
    """One pre-LN CLIP encoder layer on an [nb*ns, D] activation slab.

    wo_h is the output projection stored head-major [H, DH, D]: the head
    re-merge is folded into per-head projection accumulation (no concat).
    The 1/sqrt(DH) attention scale is folded into wqkv/bqkv offline.
    """
    # ---- self-attention (fused QKV: one full-K MXU push) ----
    h = layer_norm(x, ln1_g, ln1_b)
    qkv = mm(h, wqkv) + bqkv                                  # [nb*ns, 3D]
    qkv3 = qkv.reshape(nb, ns, 3 * D)                         # leading split only

    attn = jnp.zeros((nb * ns, D), jnp.float32)
    # Static per-head loop: contiguous lane slices + 3-D batched einsums.
    # Keeps only one [nb, ns, ns] score slab live at a time and removes every
    # stack/concat relayout of the previous version.  (At real sizes, a
    # lax.fori_loop(unroll=True) over heads gives identical codegen.)
    for hd in range(H):
        qh = qkv3[:, :, hd * DH:(hd + 1) * DH]                # [nb, ns, DH]
        kh = qkv3[:, :, D + hd * DH:D + (hd + 1) * DH]
        vh = qkv3[:, :, 2 * D + hd * DH:2 * D + (hd + 1) * DH]
        s = jnp.einsum("bqd,bkd->bqk",
                       qh.astype(jnp.bfloat16), kh.astype(jnp.bfloat16),
                       preferred_element_type=jnp.float32)    # [nb, ns, ns]
        s = s + mask[None, :, :]                              # causal mask, f32
        s = s - jnp.max(s, axis=-1, keepdims=True)
        p = jnp.exp(s)
        p = p * recip(jnp.sum(p, axis=-1, keepdims=True))     # divide -> EUP
        ah = jnp.einsum("bqk,bkd->bqd",
                        p.astype(jnp.bfloat16), vh.astype(jnp.bfloat16),
                        preferred_element_type=jnp.float32)   # [nb, ns, DH]
        # head merge folded into the output projection (wo stored [H, DH, D])
        attn = attn + mm(ah.reshape(nb * ns, DH), wo_h[hd])
    x = x + attn + bo

    # ---- MLP (pre-LN, quick_gelu) ----
    h = layer_norm(x, ln2_g, ln2_b)
    h = mm(h, w1) + b1
    h = h * jax.nn.sigmoid(1.702 * h)                         # quick_gelu, f32
    x = x + mm(h, w2) + b2
    return x


# ----------------------------- Pallas kernel --------------------------------
def clip_text_kernel(x_ref, mask_ref,
                     ln1_g_ref, ln1_b_ref, wqkv_ref, bqkv_ref, wo_ref, bo_ref,
                     ln2_g_ref, ln2_b_ref, w1_ref, b1_ref, w2_ref, b2_ref,
                     lnf_g_ref, lnf_b_ref,
                     out_ref):
    l = pl.program_id(1)

    # Residual stream lives in the output block itself (constant block index
    # across the layer axis -> VMEM resident); no separate scratch slab.
    @pl.when(l == 0)
    def _init():
        out_ref[...] = x_ref[...]

    x = clip_layer(
        out_ref[...], mask_ref[...],
        ln1_g_ref[0, 0], ln1_b_ref[0, 0],
        wqkv_ref[0], bqkv_ref[0, 0],
        wo_ref[0], bo_ref[0, 0],
        ln2_g_ref[0, 0], ln2_b_ref[0, 0],
        w1_ref[0], b1_ref[0, 0],
        w2_ref[0], b2_ref[0, 0],
        nb=TB, ns=S_PAD,
        recip=lambda d: pl.reciprocal(d, approx=True),
    )
    out_ref[...] = x

    # Final LayerNorm -> last_hidden_state, stored on the last layer step.
    @pl.when(l == pl.num_programs(1) - 1)
    def _finalize():
        out_ref[...] = layer_norm(x, lnf_g_ref[0], lnf_b_ref[0])


# ------------------------------ wrapper --------------------------------------
def _row_spec():
    # Per-batch-tile activation/output slab; constant across the layer axis
    # (so the residual carry stays resident), advances with the batch tile.
    return pl.BlockSpec((TB * S_PAD, D), lambda i, l: (i, 0))


def _const_spec(shape):
    # Constant block index across the whole grid -> DMA'd once.
    nd = len(shape)
    return pl.BlockSpec(tuple(shape), lambda i, l, _nd=nd: (0,) * _nd)


def _layer_spec(shape):
    # Per-layer weight slab, streamed one layer per inner grid step; the
    # BlockSpec pipeline double-buffers the next layer's DMA under compute.
    block = (1,) + tuple(shape[1:])
    nrest = len(shape) - 1
    return pl.BlockSpec(block, lambda i, l, _n=nrest: (l,) + (0,) * _n)


def _compiler_params():
    kwargs = dict(dimension_semantics=("parallel", "arbitrary"))
    try:
        cap = pltpu.get_tpu_info().vmem_capacity_bytes
        # ~80% of per-core VMEM: ~51 MiB on v7x, ~102 MiB on v5e/v6e.
        kwargs["vmem_limit_bytes"] = int(cap * 0.8)
    except Exception:
        pass  # fall back to the compiler's default scoped-VMEM limit
    return pltpu.CompilerParams(**kwargs)


def causal_mask(n):
    row = jax.lax.broadcasted_iota(jnp.int32, (n, n), 0)
    col = jax.lax.broadcasted_iota(jnp.int32, (n, n), 1)
    return jnp.where(col <= row, 0.0, NEG_INF).astype(jnp.float32)


def clip_text_forward(x_emb, params):
    """x_emb: [B, S, D] token+position embeddings; returns last_hidden_state."""
    # Pad the sequence so every row slab / score tile is sublane aligned (real
    # CLIP: 77 -> 128 for lane-dense tiles).  Causal masking guarantees the
    # padded rows never influence the real ones; they are sliced off below.
    x_pad = jnp.pad(x_emb.astype(jnp.float32),
                    ((0, 0), (0, S_PAD - S), (0, 0)))
    xs = x_pad.reshape(B * S_PAD, D)
    mask = causal_mask(S_PAD)   # built once in the wrapper, DMA'd once

    weight_names = ["ln1_g", "ln1_b", "wqkv", "bqkv", "wo", "bo",
                    "ln2_g", "ln2_b", "w1", "b1", "w2", "b2"]
    layer_args = [params[n] for n in weight_names]
    final_args = [params["lnf_g"], params["lnf_b"]]

    in_specs = [_row_spec(), _const_spec((S_PAD, S_PAD))]
    in_specs += [_layer_spec(w.shape) for w in layer_args]
    in_specs += [_const_spec(w.shape) for w in final_args]

    out = pl.pallas_call(
        clip_text_kernel,
        out_shape=jax.ShapeDtypeStruct((B * S_PAD, D), jnp.float32),
        grid_spec=pltpu.PrefetchScalarGridSpec(
            num_scalar_prefetch=0,
            grid=(B // TB, L),            # (parallel batch tiles, layer stream)
            in_specs=in_specs,
            out_specs=_row_spec(),        # residual carry + final output
        ),
        compiler_params=_compiler_params(),
    )(xs, mask, *layer_args, *final_args)
    return out.reshape(B, S_PAD, D)[:, :S, :]


# ------------------------- pure-JAX reference ---------------------------------
def clip_text_reference(x_emb, params):
    # Runs unpadded (B, S): also cross-checks that sequence padding is inert.
    x = x_emb.reshape(B * S, D).astype(jnp.float32)
    mask = causal_mask(S)
    for l in range(L):
        x = clip_layer(
            x, mask,
            params["ln1_g"][l, 0], params["ln1_b"][l, 0],
            params["wqkv"][l], params["bqkv"][l, 0],
            params["wo"][l], params["bo"][l, 0],
            params["ln2_g"][l, 0], params["ln2_b"][l, 0],
            params["w1"][l], params["b1"][l, 0],
            params["w2"][l], params["b2"][l, 0],
            nb=B, ns=S,
            recip=lambda d: 1.0 / d,
        )
    x = layer_norm(x, params["lnf_g"][0], params["lnf_b"][0])
    return x.reshape(B, S, D)


# ------------------------------ parameters -----------------------------------
def make_params(key):
    ks = jax.random.split(key, 16)
    init = lambda k, shape, s=0.02: (s * jax.random.normal(k, shape)).astype(jnp.float32)

    # Fused Q|K|V projection; fold 1/sqrt(DH) into the Q columns offline
    # (removes a per-layer VPU pass over the Q tensor).
    scale = 1.0 / math.sqrt(DH)
    wqkv = init(ks[4], (L, D, 3 * D))
    bqkv = init(ks[5], (L, 1, 3 * D))
    wqkv = wqkv.at[:, :, :D].multiply(scale)
    bqkv = bqkv.at[:, :, :D].multiply(scale)

    return {
        "tok_emb": init(ks[0], (VOCAB, D)),
        "pos_emb": init(ks[1], (S, D)),
        # LN params stored as [L, 1, X] so per-layer blocks keep the last-two
        # dims equal to the full array dims ((8,128) rule).
        "ln1_g": 1.0 + init(ks[2], (L, 1, D), 0.05),
        "ln1_b": init(ks[3], (L, 1, D)),
        "wqkv": wqkv.astype(jnp.bfloat16),
        "bqkv": bqkv,
        # Output projection stored head-major [H, DH, D]: head re-merge folds
        # into per-head projection accumulation (no concat in the kernel).
        "wo": init(ks[6], (L, H, DH, D)).astype(jnp.bfloat16),
        "bo": init(ks[7], (L, 1, D)),
        "ln2_g": 1.0 + init(ks[8], (L, 1, D), 0.05),
        "ln2_b": init(ks[9], (L, 1, D)),
        "w1": init(ks[10], (L, D, M)).astype(jnp.bfloat16),
        "b1": init(ks[11], (L, 1, M)),
        "w2": init(ks[12], (L, M, D)).astype(jnp.bfloat16),
        "b2": init(ks[13], (L, 1, D)),
        "lnf_g": 1.0 + init(ks[14], (1, D), 0.05),
        "lnf_b": init(ks[15], (1, D)),
    }


if __name__ == "__main__":
    key = jax.random.PRNGKey(0)
    pkey, tkey = jax.random.split(key)
    params = make_params(pkey)

    # TODO(synk): CLIPTokenizer (text -> token ids) has no Pallas equivalent;
    # start from synthetic token ids padded to max_length.
    tokens = jax.random.randint(tkey, (B, S), 0, VOCAB, dtype=jnp.int32)

    # embedding gather + positional add (glue, outside the kernel)
    x_emb = params["tok_emb"][tokens] + params["pos_emb"][None, :, :]
    x_emb = x_emb.astype(jnp.float32)

    z = clip_text_forward(x_emb, params)      # last_hidden_state [B, S, D]
    z = jax.block_until_ready(z)

    z_ref = clip_text_reference(x_emb, params)
    assert z.shape == (B, S, D) and z.dtype == jnp.float32
    err = jnp.max(jnp.abs(z - z_ref))
    assert jnp.allclose(z, z_ref, atol=2e-2, rtol=2e-2), (
        f"mismatch vs reference: max abs err {err:.3e}")

    print("KERNEL_OK")
</pallas_src>

<mosaic_0001>
module attributes {stable_mosaic.version = 11 : i64} {
  func.func @clip_text_kernel(%arg0: i32, %arg1: i32, %arg2: memref<8x32xf32, #tpu.memory_space<vmem>>, %arg3: memref<8x8xf32, #tpu.memory_space<vmem>>, %arg4: memref<1x1x32xf32, #tpu.memory_space<vmem>>, %arg5: memref<1x1x32xf32, #tpu.memory_space<vmem>>, %arg6: memref<1x32x96xbf16, #tpu.memory_space<vmem>>, %arg7: memref<1x1x96xf32, #tpu.memory_space<vmem>>, %arg8: memref<1x4x8x32xbf16, #tpu.memory_space<vmem>>, %arg9: memref<1x1x32xf32, #tpu.memory_space<vmem>>, %arg10: memref<1x1x32xf32, #tpu.memory_space<vmem>>, %arg11: memref<1x1x32xf32, #tpu.memory_space<vmem>>, %arg12: memref<1x32x128xbf16, #tpu.memory_space<vmem>>, %arg13: memref<1x1x128xf32, #tpu.memory_space<vmem>>, %arg14: memref<1x128x32xbf16, #tpu.memory_space<vmem>>, %arg15: memref<1x1x32xf32, #tpu.memory_space<vmem>>, %arg16: memref<1x32xf32, #tpu.memory_space<vmem>>, %arg17: memref<1x32xf32, #tpu.memory_space<vmem>>, %arg18: memref<8x32xf32, #tpu.memory_space<vmem>>) attributes {dimension_semantics = [#tpu.dimension_semantics<parallel>, #tpu.dimension_semantics<arbitrary>], iteration_bounds = array<i64: 2, 2>, scalar_prefetch = 0 : i64, scratch_operands = 0 : i64, tpu.core_type = #tpu.core_type<tc>, window_params = [{transform_indices = @transform_0, window_bounds = array<i64: 8, 32>}, {pipeline_mode = #tpu.pipeline_mode<synchronous>, transform_indices = @transform_1, window_bounds = array<i64: 8, 8>}, {transform_indices = @transform_2, window_bounds = array<i64: 1, 1, 32>}, {transform_indices = @transform_3, window_bounds = array<i64: 1, 1, 32>}, {transform_indices = @transform_4, window_bounds = array<i64: 1, 32, 96>}, {transform_indices = @transform_5, window_bounds = array<i64: 1, 1, 96>}, {transform_indices = @transform_6, window_bounds = array<i64: 1, 4, 8, 32>}, {transform_indices = @transform_7, window_bounds = array<i64: 1, 1, 32>}, {transform_indices = @transform_8, window_bounds = array<i64: 1, 1, 32>}, {transform_indices = @transform_9, window_bounds = array<i64: 1, 1, 32>}, {transform_indices = @transform_10, window_bounds = array<i64: 1, 32, 128>}, {transform_indices = @transform_11, window_bounds = array<i64: 1, 1, 128>}, {transform_indices = @transform_12, window_bounds = array<i64: 1, 128, 32>}, {transform_indices = @transform_13, window_bounds = array<i64: 1, 1, 32>}, {pipeline_mode = #tpu.pipeline_mode<synchronous>, transform_indices = @transform_14, window_bounds = array<i64: 1, 32>}, {pipeline_mode = #tpu.pipeline_mode<synchronous>, transform_indices = @transform_15, window_bounds = array<i64: 1, 32>}, {transform_indices = @transform_16, window_bounds = array<i64: 8, 32>}]} {
    %c0_i32 = arith.constant 0 : i32
    %0 = arith.cmpi eq, %arg1, %c0_i32 : i32
    %1 = arith.extui %0 : i1 to i32
    %c0_i32_0 = arith.constant 0 : i32
    %2 = arith.cmpi ne, %1, %c0_i32_0 : i32
    scf.if %2 {
      %c0_79 = arith.constant 0 : index
      %c0_80 = arith.constant 0 : index
      %219 = vector.load %arg2[%c0_79, %c0_80] : memref<8x32xf32, #tpu.memory_space<vmem>>, vector<8x32xf32>
      %c0_81 = arith.constant 0 : index
      %c0_82 = arith.constant 0 : index
      %220 = vector.load %arg18[%c0_81, %c0_82] : memref<8x32xf32, #tpu.memory_space<vmem>>, vector<8x32xf32>
      tpu.vector_store %arg18[%c0_81, %c0_82], %219 {strides = array<i32>} : memref<8x32xf32, #tpu.memory_space<vmem>>, vector<8x32xf32>,
    } else {
    }
    %c0 = arith.constant 0 : index
    %c0_1 = arith.constant 0 : index
    %3 = vector.load %arg18[%c0, %c0_1] : memref<8x32xf32, #tpu.memory_space<vmem>>, vector<8x32xf32>
    %c0_2 = arith.constant 0 : index
    %c0_3 = arith.constant 0 : index
    %4 = vector.load %arg3[%c0_2, %c0_3] : memref<8x8xf32, #tpu.memory_space<vmem>>, vector<8x8xf32>
    %c0_4 = arith.constant 0 : index
    %c0_5 = arith.constant 0 : index
    %c0_6 = arith.constant 0 : index
    %5 = vector.load %arg4[%c0_4, %c0_5, %c0_6] : memref<1x1x32xf32, #tpu.memory_space<vmem>>, vector<1x1x32xf32>
    %6 = vector.shape_cast %5 : vector<1x1x32xf32> to vector<32xf32>
    %c0_7 = arith.constant 0 : index
    %c0_8 = arith.constant 0 : index
    %c0_9 = arith.constant 0 : index
    %7 = vector.load %arg5[%c0_7, %c0_8, %c0_9] : memref<1x1x32xf32, #tpu.memory_space<vmem>>, vector<1x1x32xf32>
    %8 = vector.shape_cast %7 : vector<1x1x32xf32> to vector<32xf32>
    %c0_10 = arith.constant 0 : index
    %c0_11 = arith.constant 0 : index
    %c0_12 = arith.constant 0 : index
    %9 = vector.load %arg6[%c0_10, %c0_11, %c0_12] : memref<1x32x96xbf16, #tpu.memory_space<vmem>>, vector<1x32x96xbf16>
    %10 = vector.shape_cast %9 : vector<1x32x96xbf16> to vector<32x96xbf16>
    %c0_13 = arith.constant 0 : index
    %c0_14 = arith.constant 0 : index
    %c0_15 = arith.constant 0 : index
    %11 = vector.load %arg7[%c0_13, %c0_14, %c0_15] : memref<1x1x96xf32, #tpu.memory_space<vmem>>, vector<1x1x96xf32>
    %12 = vector.shape_cast %11 : vector<1x1x96xf32> to vector<96xf32>
    %c0_16 = arith.constant 0 : index
    %c0_17 = arith.constant 0 : index
    %c0_18 = arith.constant 0 : index
    %c0_19 = arith.constant 0 : index
    %13 = vector.load %arg8[%c0_16, %c0_17, %c0_18, %c0_19] : memref<1x4x8x32xbf16, #tpu.memory_space<vmem>>, vector<1x4x8x32xbf16>
    %14 = vector.shape_cast %13 : vector<1x4x8x32xbf16> to vector<4x8x32xbf16>
    %c0_20 = arith.constant 0 : index
    %c0_21 = arith.constant 0 : index
    %c0_22 = arith.constant 0 : index
    %15 = vector.load %arg9[%c0_20, %c0_21, %c0_22] : memref<1x1x32xf32, #tpu.memory_space<vmem>>, vector<1x1x32xf32>
    %16 = vector.shape_cast %15 : vector<1x1x32xf32> to vector<32xf32>
    %c0_23 = arith.constant 0 : index
    %c0_24 = arith.constant 0 : index
    %c0_25 = arith.constant 0 : index
    %17 = vector.load %arg10[%c0_23, %c0_24, %c0_25] : memref<1x1x32xf32, #tpu.memory_space<vmem>>, vector<1x1x32xf32>
    %18 = vector.shape_cast %17 : vector<1x1x32xf32> to vector<32xf32>
    %c0_26 = arith.constant 0 : index
    %c0_27 = arith.constant 0 : index
    %c0_28 = arith.constant 0 : index
    %19 = vector.load %arg11[%c0_26, %c0_27, %c0_28] : memref<1x1x32xf32, #tpu.memory_space<vmem>>, vector<1x1x32xf32>
    %20 = vector.shape_cast %19 : vector<1x1x32xf32> to vector<32xf32>
    %c0_29 = arith.constant 0 : index
    %c0_30 = arith.constant 0 : index
    %c0_31 = arith.constant 0 : index
    %21 = vector.load %arg12[%c0_29, %c0_30, %c0_31] : memref<1x32x128xbf16, #tpu.memory_space<vmem>>, vector<1x32x128xbf16>
    %22 = vector.shape_cast %21 : vector<1x32x128xbf16> to vector<32x128xbf16>
    %c0_32 = arith.constant 0 : index
    %c0_33 = arith.constant 0 : index
    %c0_34 = arith.constant 0 : index
    %23 = vector.load %arg13[%c0_32, %c0_33, %c0_34] : memref<1x1x128xf32, #tpu.memory_space<vmem>>, vector<1x1x128xf32>
    %24 = vector.shape_cast %23 : vector<1x1x128xf32> to vector<128xf32>
    %c0_35 = arith.constant 0 : index
    %c0_36 = arith.constant 0 : index
    %c0_37 = arith.constant 0 : index
    %25 = vector.load %arg14[%c0_35, %c0_36, %c0_37] : memref<1x128x32xbf16, #tpu.memory_space<vmem>>, vector<1x128x32xbf16>
    %26 = vector.shape_cast %25 : vector<1x128x32xbf16> to vector<128x32xbf16>
    %c0_38 = arith.constant 0 : index
    %c0_39 = arith.constant 0 : index
    %c0_40 = arith.constant 0 : index
    %27 = vector.load %arg15[%c0_38, %c0_39, %c0_40] : memref<1x1x32xf32, #tpu.memory_space<vmem>>, vector<1x1x32xf32>
    %28 = vector.shape_cast %27 : vector<1x1x32xf32> to vector<32xf32>
    %cst = arith.constant dense<0.000000e+00> : vector<8xf32>
    %29 = vector.multi_reduction <add>, %3, %cst [1] : vector<8x32xf32> to vector<8xf32>
    %30 = vector.shape_cast %29 : vector<8xf32> to vector<8x1xf32>
    %cst_41 = arith.constant 3.200000e+01 : f32
    %31 = vector.broadcast %cst_41 : f32 to vector<8x1xf32>
    %32 = arith.divf %30, %31 : vector<8x1xf32>
    %33 = vector.broadcast %32 : vector<8x1xf32> to vector<8x32xf32>
    %34 = arith.subf %3, %33 : vector<8x32xf32>
    %35 = arith.mulf %34, %34 : vector<8x32xf32>
    %cst_42 = arith.constant dense<0.000000e+00> : vector<8xf32>
    %36 = vector.multi_reduction <add>, %35, %cst_42 [1] : vector<8x32xf32> to vector<8xf32>
    %37 = vector.shape_cast %36 : vector<8xf32> to vector<8x1xf32>
    %cst_43 = arith.constant 3.200000e+01 : f32
    %38 = vector.broadcast %cst_43 : f32 to vector<8x1xf32>
    %39 = arith.divf %37, %38 : vector<8x1xf32>
    %40 = vector.broadcast %32 : vector<8x1xf32> to vector<8x32xf32>
    %41 = arith.subf %3, %40 : vector<8x32xf32>
    %cst_44 = arith.constant 9.99999974E-6 : f32
    %42 = vector.broadcast %cst_44 : f32 to vector<8x1xf32>
    %43 = arith.addf %39, %42 : vector<8x1xf32>
    %44 = math.rsqrt %43 : vector<8x1xf32>
    %45 = vector.broadcast %44 : vector<8x1xf32> to vector<8x32xf32>
    %46 = arith.mulf %41, %45 : vector<8x32xf32>
    %47 = vector.shape_cast %6 : vector<32xf32> to vector<1x32xf32>
    %48 = vector.broadcast %47 : vector<1x32xf32> to vector<8x32xf32>
    %49 = arith.mulf %46, %48 : vector<8x32xf32>
    %50 = vector.shape_cast %8 : vector<32xf32> to vector<1x32xf32>
    %51 = vector.broadcast %50 : vector<1x32xf32> to vector<8x32xf32>
    %52 = arith.addf %49, %51 : vector<8x32xf32>
    %53 = arith.truncf %52 : vector<8x32xf32> to vector<8x32xbf16>
    %cst_45 = arith.constant dense<0.000000e+00> : vector<8x96xf32>
    %54 = tpu.matmul %53, %10, %cst_45 {dimension_numbers = #tpu.dot_dimension_numbers<[1], [0], [0], [1], [0, 0, 1, 1], [], []>} : vector<8x32xbf16>, vector<32x96xbf16>, vector<8x96xf32> -> vector<8x96xf32>
    %55 = vector.shape_cast %12 : vector<96xf32> to vector<1x96xf32>
    %56 = vector.broadcast %55 : vector<1x96xf32> to vector<8x96xf32>
    %57 = arith.addf %54, %56 : vector<8x96xf32>
    %58 = vector.shape_cast %57 : vector<8x96xf32> to vector<1x8x96xf32>
    %cst_46 = arith.constant 0.000000e+00 : f32
    %59 = vector.broadcast %cst_46 : f32 to vector<8x32xf32>
    %60 = vector.extract_strided_slice %58 {offsets = [0, 0, 0], sizes = [1, 8, 8], strides = [1, 1, 1]} : vector<1x8x96xf32> to vector<1x8x8xf32>
    %61 = vector.extract_strided_slice %58 {offsets = [0, 0, 32], sizes = [1, 8, 8], strides = [1, 1, 1]} : vector<1x8x96xf32> to vector<1x8x8xf32>
    %62 = vector.extract_strided_slice %58 {offsets = [0, 0, 64], sizes = [1, 8, 8], strides = [1, 1, 1]} : vector<1x8x96xf32> to vector<1x8x8xf32>
    %63 = arith.truncf %60 : vector<1x8x8xf32> to vector<1x8x8xbf16>
    %64 = arith.truncf %61 : vector<1x8x8xf32> to vector<1x8x8xbf16>
    "tpu.trace_start"() <{level = 10 : i32, message = "bqd,bkd->bqk"}> : () -> ()
    %cst_47 = arith.constant dense<0.000000e+00> : vector<1x8x8xf32>
    %65 = tpu.matmul %63, %64, %cst_47 {dimension_numbers = #tpu.dot_dimension_numbers<[2], [2], [1], [1], [0, 0, 0, 1, 1, 1], [0], [0]>} : vector<1x8x8xbf16>, vector<1x8x8xbf16>, vector<1x8x8xf32> -> vector<1x8x8xf32>
    "tpu.trace_stop"() : () -> ()
    %66 = vector.shape_cast %4 : vector<8x8xf32> to vector<1x8x8xf32>
    %67 = arith.addf %65, %66 : vector<1x8x8xf32>
    %cst_48 = arith.constant dense<0xFF800000> : vector<1x8xf32>
    %68 = vector.multi_reduction <maximumf>, %67, %cst_48 [2] : vector<1x8x8xf32> to vector<1x8xf32>
    %69 = vector.shape_cast %68 : vector<1x8xf32> to vector<1x8x1xf32>
    %70 = vector.broadcast %69 : vector<1x8x1xf32> to vector<1x8x8xf32>
    %71 = arith.subf %67, %70 : vector<1x8x8xf32>
    %72 = math.exp %71 : vector<1x8x8xf32>
    %cst_49 = arith.constant dense<0.000000e+00> : vector<1x8xf32>
    %73 = vector.multi_reduction <add>, %72, %cst_49 [2] : vector<1x8x8xf32> to vector<1x8xf32>
    %74 = vector.shape_cast %73 : vector<1x8xf32> to vector<1x8x1xf32>
    %75 = tpu.reciprocal %74 {approx = true} : vector<1x8x1xf32> -> vector<1x8x1xf32>
    %76 = vector.broadcast %75 : vector<1x8x1xf32> to vector<1x8x8xf32>
    %77 = arith.mulf %72, %76 : vector<1x8x8xf32>
    %78 = arith.truncf %77 : vector<1x8x8xf32> to vector<1x8x8xbf16>
    %79 = arith.truncf %62 : vector<1x8x8xf32> to vector<1x8x8xbf16>
    "tpu.trace_start"() <{level = 10 : i32, message = "bqk,bkd->bqd"}> : () -> ()
    %cst_50 = arith.constant dense<0.000000e+00> : vector<1x8x8xf32>
    %80 = tpu.matmul %78, %79, %cst_50 {dimension_numbers = #tpu.dot_dimension_numbers<[2], [1], [1], [2], [0, 0, 0, 1, 1, 2], [0], [0]>} : vector<1x8x8xbf16>, vector<1x8x8xbf16>, vector<1x8x8xf32> -> vector<1x8x8xf32>
    "tpu.trace_stop"() : () -> ()
    %81 = vector.shape_cast %80 : vector<1x8x8xf32> to vector<8x8xf32>
    %82 = vector.extract_strided_slice %14 {offsets = [0, 0, 0], sizes = [1, 8, 32], strides = [1, 1, 1]} : vector<4x8x32xbf16> to vector<1x8x32xbf16>
    %83 = vector.shape_cast %82 : vector<1x8x32xbf16> to vector<8x32xbf16>
    %84 = arith.truncf %81 : vector<8x8xf32> to vector<8x8xbf16>
    %cst_51 = arith.constant dense<0.000000e+00> : vector<8x32xf32>
    %85 = tpu.matmul %84, %83, %cst_51 {dimension_numbers = #tpu.dot_dimension_numbers<[1], [0], [0], [1], [0, 0, 1, 1], [], []>} : vector<8x8xbf16>, vector<8x32xbf16>, vector<8x32xf32> -> vector<8x32xf32>
    %86 = arith.addf %59, %85 : vector<8x32xf32>
    %87 = vector.extract_strided_slice %58 {offsets = [0, 0, 8], sizes = [1, 8, 8], strides = [1, 1, 1]} : vector<1x8x96xf32> to vector<1x8x8xf32>
    %88 = vector.extract_strided_slice %58 {offsets = [0, 0, 40], sizes = [1, 8, 8], strides = [1, 1, 1]} : vector<1x8x96xf32> to vector<1x8x8xf32>
    %89 = vector.extract_strided_slice %58 {offsets = [0, 0, 72], sizes = [1, 8, 8], strides = [1, 1, 1]} : vector<1x8x96xf32> to vector<1x8x8xf32>
    %90 = arith.truncf %87 : vector<1x8x8xf32> to vector<1x8x8xbf16>
    %91 = arith.truncf %88 : vector<1x8x8xf32> to vector<1x8x8xbf16>
    "tpu.trace_start"() <{level = 10 : i32, message = "bqd,bkd->bqk"}> : () -> ()
    %cst_52 = arith.constant dense<0.000000e+00> : vector<1x8x8xf32>
    %92 = tpu.matmul %90, %91, %cst_52 {dimension_numbers = #tpu.dot_dimension_numbers<[2], [2], [1], [1], [0, 0, 0, 1, 1, 1], [0], [0]>} : vector<1x8x8xbf16>, vector<1x8x8xbf16>, vector<1x8x8xf32> -> vector<1x8x8xf32>
    "tpu.trace_stop"() : () -> ()
    %93 = vector.shape_cast %4 : vector<8x8xf32> to vector<1x8x8xf32>
    %94 = arith.addf %92, %93 : vector<1x8x8xf32>
    %cst_53 = arith.constant dense<0xFF800000> : vector<1x8xf32>
    %95 = vector.multi_reduction <maximumf>, %94, %cst_53 [2] : vector<1x8x8xf32> to vector<1x8xf32>
    %96 = vector.shape_cast %95 : vector<1x8xf32> to vector<1x8x1xf32>
    %97 = vector.broadcast %96 : vector<1x8x1xf32> to vector<1x8x8xf32>
    %98 = arith.subf %94, %97 : vector<1x8x8xf32>
    %99 = math.exp %98 : vector<1x8x8xf32>
    %cst_54 = arith.constant dense<0.000000e+00> : vector<1x8xf32>
    %100 = vector.multi_reduction <add>, %99, %cst_54 [2] : vector<1x8x8xf32> to vector<1x8xf32>
    %101 = vector.shape_cast %100 : vector<1x8xf32> to vector<1x8x1xf32>
    %102 = tpu.reciprocal %101 {approx = true} : vector<1x8x1xf32> -> vector<1x8x1xf32>
    %103 = vector.broadcast %102 : vector<1x8x1xf32> to vector<1x8x8xf32>
    %104 = arith.mulf %99, %103 : vector<1x8x8xf32>
    %105 = arith.truncf %104 : vector<1x8x8xf32> to vector<1x8x8xbf16>
    %106 = arith.truncf %89 : vector<1x8x8xf32> to vector<1x8x8xbf16>
    "tpu.trace_start"() <{level = 10 : i32, message = "bqk,bkd->bqd"}> : () -> ()
    %cst_55 = arith.constant dense<0.000000e+00> : vector<1x8x8xf32>
    %107 = tpu.matmul %105, %106, %cst_55 {dimension_numbers = #tpu.dot_dimension_numbers<[2], [1], [1], [2], [0, 0, 0, 1, 1, 2], [0], [0]>} : vector<1x8x8xbf16>, vector<1x8x8xbf16>, vector<1x8x8xf32> -> vector<1x8x8xf32>
    "tpu.trace_stop"() : () -> ()
    %108 = vector.shape_cast %107 : vector<1x8x8xf32> to vector<8x8xf32>
    %109 = vector.extract_strided_slice %14 {offsets = [1, 0, 0], sizes = [1, 8, 32], strides = [1, 1, 1]} : vector<4x8x32xbf16> to vector<1x8x32xbf16>
    %110 = vector.shape_cast %109 : vector<1x8x32xbf16> to vector<8x32xbf16>
    %111 = arith.truncf %108 : vector<8x8xf32> to vector<8x8xbf16>
    %cst_56 = arith.constant dense<0.000000e+00> : vector<8x32xf32>
    %112 = tpu.matmul %111, %110, %cst_56 {dimension_numbers = #tpu.dot_dimension_numbers<[1], [0], [0], [1], [0, 0, 1, 1], [], []>} : vector<8x8xbf16>, vector<8x32xbf16>, vector<8x32xf32> -> vector<8x32xf32>
    %113 = arith.addf %86, %112 : vector<8x32xf32>
    %114 = vector.extract_strided_slice %58 {offsets = [0, 0, 16], sizes = [1, 8, 8], strides = [1, 1, 1]} : vector<1x8x96xf32> to vector<1x8x8xf32>
    %115 = vector.extract_strided_slice %58 {offsets = [0, 0, 48], sizes = [1, 8, 8], strides = [1, 1, 1]} : vector<1x8x96xf32> to vector<1x8x8xf32>
    %116 = vector.extract_strided_slice %58 {offsets = [0, 0, 80], sizes = [1, 8, 8], strides = [1, 1, 1]} : vector<1x8x96xf32> to vector<1x8x8xf32>
    %117 = arith.truncf %114 : vector<1x8x8xf32> to vector<1x8x8xbf16>
    %118 = arith.truncf %115 : vector<1x8x8xf32> to vector<1x8x8xbf16>
    "tpu.trace_start"() <{level = 10 : i32, message = "bqd,bkd->bqk"}> : () -> ()
    %cst_57 = arith.constant dense<0.000000e+00> : vector<1x8x8xf32>
    %119 = tpu.matmul %117, %118, %cst_57 {dimension_numbers = #tpu.dot_dimension_numbers<[2], [2], [1], [1], [0, 0, 0, 1, 1, 1], [0], [0]>} : vector<1x8x8xbf16>, vector<1x8x8xbf16>, vector<1x8x8xf32> -> vector<1x8x8xf32>
    "tpu.trace_stop"() : () -> ()
    %120 = vector.shape_cast %4 : vector<8x8xf32> to vector<1x8x8xf32>
    %121 = arith.addf %119, %120 : vector<1x8x8xf32>
    %cst_58 = arith.constant dense<0xFF800000> : vector<1x8xf32>
    %122 = vector.multi_reduction <maximumf>, %121, %cst_58 [2] : vector<1x8x8xf32> to vector<1x8xf32>
    %123 = vector.shape_cast %122 : vector<1x8xf32> to vector<1x8x1xf32>
    %124 = vector.broadcast %123 : vector<1x8x1xf32> to vector<1x8x8xf32>
    %125 = arith.subf %121, %124 : vector<1x8x8xf32>
    %126 = math.exp %125 : vector<1x8x8xf32>
    %cst_59 = arith.constant dense<0.000000e+00> : vector<1x8xf32>
    %127 = vector.multi_reduction <add>, %126, %cst_59 [2] : vector<1x8x8xf32> to vector<1x8xf32>
    %128 = vector.shape_cast %127 : vector<1x8xf32> to vector<1x8x1xf32>
    %129 = tpu.reciprocal %128 {approx = true} : vector<1x8x1xf32> -> vector<1x8x1xf32>
    %130 = vector.broadcast %129 : vector<1x8x1xf32> to vector<1x8x8xf32>
    %131 = arith.mulf %126, %130 : vector<1x8x8xf32>
    %132 = arith.truncf %131 : vector<1x8x8xf32> to vector<1x8x8xbf16>
    %133 = arith.truncf %116 : vector<1x8x8xf32> to vector<1x8x8xbf16>
    "tpu.trace_start"() <{level = 10 : i32, message = "bqk,bkd->bqd"}> : () -> ()
    %cst_60 = arith.constant dense<0.000000e+00> : vector<1x8x8xf32>
    %134 = tpu.matmul %132, %133, %cst_60 {dimension_numbers = #tpu.dot_dimension_numbers<[2], [1], [1], [2], [0, 0, 0, 1, 1, 2], [0], [0]>} : vector<1x8x8xbf16>, vector<1x8x8xbf16>, vector<1x8x8xf32> -> vector<1x8x8xf32>
    "tpu.trace_stop"() : () -> ()
    %135 = vector.shape_cast %134 : vector<1x8x8xf32> to vector<8x8xf32>
    %136 = vector.extract_strided_slice %14 {offsets = [2, 0, 0], sizes = [1, 8, 32], strides = [1, 1, 1]} : vector<4x8x32xbf16> to vector<1x8x32xbf16>
    %137 = vector.shape_cast %136 : vector<1x8x32xbf16> to vector<8x32xbf16>
    %138 = arith.truncf %135 : vector<8x8xf32> to vector<8x8xbf16>
    %cst_61 = arith.constant dense<0.000000e+00> : vector<8x32xf32>
    %139 = tpu.matmul %138, %137, %cst_61 {dimension_numbers = #tpu.dot_dimension_numbers<[1], [0], [0], [1], [0, 0, 1, 1], [], []>} : vector<8x8xbf16>, vector<8x32xbf16>, vector<8x32xf32> -> vector<8x32xf32>
    %140 = arith.addf %113, %139 : vector<8x32xf32>
    %141 = vector.extract_strided_slice %58 {offsets = [0, 0, 24], sizes = [1, 8, 8], strides = [1, 1, 1]} : vector<1x8x96xf32> to vector<1x8x8xf32>
    %142 = vector.extract_strided_slice %58 {offsets = [0, 0, 56], sizes = [1, 8, 8], strides = [1, 1, 1]} : vector<1x8x96xf32> to vector<1x8x8xf32>
    %143 = vector.extract_strided_slice %58 {offsets = [0, 0, 88], sizes = [1, 8, 8], strides = [1, 1, 1]} : vector<1x8x96xf32> to vector<1x8x8xf32>
    %144 = arith.truncf %141 : vector<1x8x8xf32> to vector<1x8x8xbf16>
    %145 = arith.truncf %142 : vector<1x8x8xf32> to vector<1x8x8xbf16>
    "tpu.trace_start"() <{level = 10 : i32, message = "bqd,bkd->bqk"}> : () -> ()
    %cst_62 = arith.constant dense<0.000000e+00> : vector<1x8x8xf32>
    %146 = tpu.matmul %144, %145, %cst_62 {dimension_numbers = #tpu.dot_dimension_numbers<[2], [2], [1], [1], [0, 0, 0, 1, 1, 1], [0], [0]>} : vector<1x8x8xbf16>, vector<1x8x8xbf16>, vector<1x8x8xf32> -> vector<1x8x8xf32>
    "tpu.trace_stop"() : () -> ()
    %147 = vector.shape_cast %4 : vector<8x8xf32> to vector<1x8x8xf32>
    %148 = arith.addf %146, %147 : vector<1x8x8xf32>
    %cst_63 = arith.constant dense<0xFF800000> : vector<1x8xf32>
    %149 = vector.multi_reduction <maximumf>, %148, %cst_63 [2] : vector<1x8x8xf32> to vector<1x8xf32>
    %150 = vector.shape_cast %149 : vector<1x8xf32> to vector<1x8x1xf32>
    %151 = vector.broadcast %150 : vector<1x8x1xf32> to vector<1x8x8xf32>
    %152 = arith.subf %148, %151 : vector<1x8x8xf32>
    %153 = math.exp %152 : vector<1x8x8xf32>
    %cst_64 = arith.constant dense<0.000000e+00> : vector<1x8xf32>
    %154 = vector.multi_reduction <add>, %153, %cst_64 [2] : vector<1x8x8xf32> to vector<1x8xf32>
    %155 = vector.shape_cast %154 : vector<1x8xf32> to vector<1x8x1xf32>
    %156 = tpu.reciprocal %155 {approx = true} : vector<1x8x1xf32> -> vector<1x8x1xf32>
    %157 = vector.broadcast %156 : vector<1x8x1xf32> to vector<1x8x8xf32>
    %158 = arith.mulf %153, %157 : vector<1x8x8xf32>
    %159 = arith.truncf %158 : vector<1x8x8xf32> to vector<1x8x8xbf16>
    %160 = arith.truncf %143 : vector<1x8x8xf32> to vector<1x8x8xbf16>
    "tpu.trace_start"() <{level = 10 : i32, message = "bqk,bkd->bqd"}> : () -> ()
    %cst_65 = arith.constant dense<0.000000e+00> : vector<1x8x8xf32>
    %161 = tpu.matmul %159, %160, %cst_65 {dimension_numbers = #tpu.dot_dimension_numbers<[2], [1], [1], [2], [0, 0, 0, 1, 1, 2], [0], [0]>} : vector<1x8x8xbf16>, vector<1x8x8xbf16>, vector<1x8x8xf32> -> vector<1x8x8xf32>
    "tpu.trace_stop"() : () -> ()
    %162 = vector.shape_cast %161 : vector<1x8x8xf32> to vector<8x8xf32>
    %163 = vector.extract_strided_slice %14 {offsets = [3, 0, 0], sizes = [1, 8, 32], strides = [1, 1, 1]} : vector<4x8x32xbf16> to vector<1x8x32xbf16>
    %164 = vector.shape_cast %163 : vector<1x8x32xbf16> to vector<8x32xbf16>
    %165 = arith.truncf %162 : vector<8x8xf32> to vector<8x8xbf16>
    %cst_66 = arith.constant dense<0.000000e+00> : vector<8x32xf32>
    %166 = tpu.matmul %165, %164, %cst_66 {dimension_numbers = #tpu.dot_dimension_numbers<[1], [0], [0], [1], [0, 0, 1, 1], [], []>} : vector<8x8xbf16>, vector<8x32xbf16>, vector<8x32xf32> -> vector<8x32xf32>
    %167 = arith.addf %140, %166 : vector<8x32xf32>
    %168 = arith.addf %3, %167 : vector<8x32xf32>
    %169 = vector.shape_cast %16 : vector<32xf32> to vector<1x32xf32>
    %170 = vector.broadcast %169 : vector<1x32xf32> to vector<8x32xf32>
    %171 = arith.addf %168, %170 : vector<8x32xf32>
    %cst_67 = arith.constant dense<0.000000e+00> : vector<8xf32>
    %172 = vector.multi_reduction <add>, %171, %cst_67 [1] : vector<8x32xf32> to vector<8xf32>
    %173 = vector.shape_cast %172 : vector<8xf32> to vector<8x1xf32>
    %cst_68 = arith.constant 3.200000e+01 : f32
    %174 = vector.broadcast %cst_68 : f32 to vector<8x1xf32>
    %175 = arith.divf %173, %174 : vector<8x1xf32>
    %176 = vector.broadcast %175 : vector<8x1xf32> to vector<8x32xf32>
    %177 = arith.subf %171, %176 : vector<8x32xf32>
    %178 = arith.mulf %177, %177 : vector<8x32xf32>
    %cst_69 = arith.constant dense<0.000000e+00> : vector<8xf32>
    %179 = vector.multi_reduction <add>, %178, %cst_69 [1] : vector<8x32xf32> to vector<8xf32>
    %180 = vector.shape_cast %179 : vector<8xf32> to vector<8x1xf32>
    %cst_70 = arith.constant 3.200000e+01 : f32
    %181 = vector.broadcast %cst_70 : f32 to vector<8x1xf32>
    %182 = arith.divf %180, %181 : vector<8x1xf32>
    %183 = vector.broadcast %175 : vector<8x1xf32> to vector<8x32xf32>
    %184 = arith.subf %171, %183 : vector<8x32xf32>
    %cst_71 = arith.constant 9.99999974E-6 : f32
    %185 = vector.broadcast %cst_71 : f32 to vector<8x1xf32>
    %186 = arith.addf %182, %185 : vector<8x1xf32>
    %187 = math.rsqrt %186 : vector<8x1xf32>
    %188 = vector.broadcast %187 : vector<8x1xf32> to vector<8x32xf32>
    %189 = arith.mulf %184, %188 : vector<8x32xf32>
    %190 = vector.shape_cast %18 : vector<32xf32> to vector<1x32xf32>
    %191 = vector.broadcast %190 : vector<1x32xf32> to vector<8x32xf32>
    %192 = arith.mulf %189, %191 : vector<8x32xf32>
    %193 = vector.shape_cast %20 : vector<32xf32> to vector<1x32xf32>
    %194 = vector.broadcast %193 : vector<1x32xf32> to vector<8x32xf32>
    %195 = arith.addf %192, %194 : vector<8x32xf32>
    %196 = arith.truncf %195 : vector<8x32xf32> to vector<8x32xbf16>
    %cst_72 = arith.constant dense<0.000000e+00> : vector<8x128xf32>
    %197 = tpu.matmul %196, %22, %cst_72 {dimension_numbers = #tpu.dot_dimension_numbers<[1], [0], [0], [1], [0, 0, 1, 1], [], []>} : vector<8x32xbf16>, vector<32x128xbf16>, vector<8x128xf32> -> vector<8x128xf32>
    %198 = vector.shape_cast %24 : vector<128xf32> to vector<1x128xf32>
    %199 = vector.broadcast %198 : vector<1x128xf32> to vector<8x128xf32>
    %200 = arith.addf %197, %199 : vector<8x128xf32>
    %cst_73 = arith.constant 1.702000e+00 : f32
    %201 = vector.broadcast %cst_73 : f32 to vector<8x128xf32>
    %202 = arith.mulf %201, %200 : vector<8x128xf32>
    %203 = arith.negf %202 : vector<8x128xf32>
    %204 = math.exp %203 : vector<8x128xf32>
    %cst_74 = arith.constant 1.000000e+00 : f32
    %205 = vector.broadcast %cst_74 : f32 to vector<8x128xf32>
    %206 = arith.addf %205, %204 : vector<8x128xf32>
    %207 = arith.divf %205, %206 : vector<8x128xf32>
    %208 = arith.mulf %200, %207 : vector<8x128xf32>
    %209 = arith.truncf %208 : vector<8x128xf32> to vector<8x128xbf16>
    %cst_75 = arith.constant dense<0.000000e+00> : vector<8x32xf32>
    %210 = tpu.matmul %209, %26, %cst_75 {dimension_numbers = #tpu.dot_dimension_numbers<[1], [0], [0], [1], [0, 0, 1, 1], [], []>} : vector<8x128xbf16>, vector<128x32xbf16>, vector<8x32xf32> -> vector<8x32xf32>
    %211 = arith.addf %171, %210 : vector<8x32xf32>
    %212 = vector.shape_cast %28 : vector<32xf32> to vector<1x32xf32>
    %213 = vector.broadcast %212 : vector<1x32xf32> to vector<8x32xf32>
    %214 = arith.addf %211, %213 : vector<8x32xf32>
    %c0_76 = arith.constant 0 : index
    %c0_77 = arith.constant 0 : index
    %215 = vector.load %arg18[%c0_76, %c0_77] : memref<8x32xf32, #tpu.memory_space<vmem>>, vector<8x32xf32>
    tpu.vector_store %arg18[%c0_76, %c0_77], %214 {strides = array<i32>} : memref<8x32xf32, #tpu.memory_space<vmem>>, vector<8x32xf32>,
    %c1_i32 = arith.constant 1 : i32
    %216 = arith.cmpi eq, %arg1, %c1_i32 : i32
    %217 = arith.extui %216 : i1 to i32
    %c0_i32_78 = arith.constant 0 : i32
    %218 = arith.cmpi ne, %217, %c0_i32_78 : i32
    scf.if %218 {
      %c0_79 = arith.constant 0 : index
      %c0_80 = arith.constant 0 : index
      %219 = vector.load %arg16[%c0_79, %c0_80] : memref<1x32xf32, #tpu.memory_space<vmem>>, vector<1x32xf32>
      %220 = vector.shape_cast %219 : vector<1x32xf32> to vector<32xf32>
      %c0_81 = arith.constant 0 : index
      %c0_82 = arith.constant 0 : index
      %221 = vector.load %arg17[%c0_81, %c0_82] : memref<1x32xf32, #tpu.memory_space<vmem>>, vector<1x32xf32>
      %222 = vector.shape_cast %221 : vector<1x32xf32> to vector<32xf32>
      %cst_83 = arith.constant dense<0.000000e+00> : vector<8xf32>
      %223 = vector.multi_reduction <add>, %214, %cst_83 [1] : vector<8x32xf32> to vector<8xf32>
      %224 = vector.shape_cast %223 : vector<8xf32> to vector<8x1xf32>
      %cst_84 = arith.constant 3.200000e+01 : f32
      %225 = vector.broadcast %cst_84 : f32 to vector<8x1xf32>
      %226 = arith.divf %224, %225 : vector<8x1xf32>
      %227 = vector.broadcast %226 : vector<8x1xf32> to vector<8x32xf32>
      %228 = arith.subf %214, %227 : vector<8x32xf32>
      %229 = arith.mulf %228, %228 : vector<8x32xf32>
      %cst_85 = arith.constant dense<0.000000e+00> : vector<8xf32>
      %230 = vector.multi_reduction <add>, %229, %cst_85 [1] : vector<8x32xf32> to vector<8xf32>
      %231 = vector.shape_cast %230 : vector<8xf32> to vector<8x1xf32>
      %cst_86 = arith.constant 3.200000e+01 : f32
      %232 = vector.broadcast %cst_86 : f32 to vector<8x1xf32>
      %233 = arith.divf %231, %232 : vector<8x1xf32>
      %234 = vector.broadcast %226 : vector<8x1xf32> to vector<8x32xf32>
      %235 = arith.subf %214, %234 : vector<8x32xf32>
      %cst_87 = arith.constant 9.99999974E-6 : f32
      %236 = vector.broadcast %cst_87 : f32 to vector<8x1xf32>
      %237 = arith.addf %233, %236 : vector<8x1xf32>
      %238 = math.rsqrt %237 : vector<8x1xf32>
      %239 = vector.broadcast %238 : vector<8x1xf32> to vector<8x32xf32>
      %240 = arith.mulf %235, %239 : vector<8x32xf32>
      %241 = vector.shape_cast %220 : vector<32xf32> to vector<1x32xf32>
      %242 = vector.broadcast %241 : vector<1x32xf32> to vector<8x32xf32>
      %243 = arith.mulf %240, %242 : vector<8x32xf32>
      %244 = vector.shape_cast %222 : vector<32xf32> to vector<1x32xf32>
      %245 = vector.broadcast %244 : vector<1x32xf32> to vector<8x32xf32>
      %246 = arith.addf %243, %245 : vector<8x32xf32>
      %c0_88 = arith.constant 0 : index
      %c0_89 = arith.constant 0 : index
      %247 = vector.load %arg18[%c0_88, %c0_89] : memref<8x32xf32, #tpu.memory_space<vmem>>, vector<8x32xf32>
      tpu.vector_store %arg18[%c0_88, %c0_89], %246 {strides = array<i32>} : memref<8x32xf32, #tpu.memory_space<vmem>>, vector<8x32xf32>,
    } else {
    }
    return
  }
  func.func @transform_0(%arg0: i32, %arg1: i32) -> (i32, i32) {
    %c0_i32 = arith.constant 0 : i32
    %c0_i32_0 = arith.constant 0 : i32
    return %arg0, %c0_i32 : i32, i32
  }
  func.func @transform_1(%arg0: i32, %arg1: i32) -> (i32, i32) {
    %c0_i32 = arith.constant 0 : i32
    %c0_i32_0 = arith.constant 0 : i32
    %c0_i32_1 = arith.constant 0 : i32
    return %c0_i32, %c0_i32_0 : i32, i32
  }
  func.func @transform_2(%arg0: i32, %arg1: i32) -> (i32, i32, i32) {
    %c0_i32 = arith.constant 0 : i32
    %c0_i32_0 = arith.constant 0 : i32
    %c0_i32_1 = arith.constant 0 : i32
    return %arg1, %c0_i32, %c0_i32_0 : i32, i32, i32
  }
  func.func @transform_3(%arg0: i32, %arg1: i32) -> (i32, i32, i32) {
    %c0_i32 = arith.constant 0 : i32
    %c0_i32_0 = arith.constant 0 : i32
    %c0_i32_1 = arith.constant 0 : i32
    return %arg1, %c0_i32, %c0_i32_0 : i32, i32, i32
  }
  func.func @transform_4(%arg0: i32, %arg1: i32) -> (i32, i32, i32) {
    %c0_i32 = arith.constant 0 : i32
    %c0_i32_0 = arith.constant 0 : i32
    %c0_i32_1 = arith.constant 0 : i32
    return %arg1, %c0_i32, %c0_i32_0 : i32, i32, i32
  }
  func.func @transform_5(%arg0: i32, %arg1: i32) -> (i32, i32, i32) {
    %c0_i32 = arith.constant 0 : i32
    %c0_i32_0 = arith.constant 0 : i32
    %c0_i32_1 = arith.constant 0 : i32
    return %arg1, %c0_i32, %c0_i32_0 : i32, i32, i32
  }
  func.func @transform_6(%arg0: i32, %arg1: i32) -> (i32, i32, i32, i32) {
    %c0_i32 = arith.constant 0 : i32
    %c0_i32_0 = arith.constant 0 : i32
    %c0_i32_1 = arith.constant 0 : i32
    %c0_i32_2 = arith.constant 0 : i32
    return %arg1, %c0_i32, %c0_i32_0, %c0_i32_1 : i32, i32, i32, i32
  }
  func.func @transform_7(%arg0: i32, %arg1: i32) -> (i32, i32, i32) {
    %c0_i32 = arith.constant 0 : i32
    %c0_i32_0 = arith.constant 0 : i32
    %c0_i32_1 = arith.constant 0 : i32
    return %arg1, %c0_i32, %c0_i32_0 : i32, i32, i32
  }
  func.func @transform_8(%arg0: i32, %arg1: i32) -> (i32, i32, i32) {
    %c0_i32 = arith.constant 0 : i32
    %c0_i32_0 = arith.constant 0 : i32
    %c0_i32_1 = arith.constant 0 : i32
    return %arg1, %c0_i32, %c0_i32_0 : i32, i32, i32
  }
  func.func @transform_9(%arg0: i32, %arg1: i32) -> (i32, i32, i32) {
    %c0_i32 = arith.constant 0 : i32
    %c0_i32_0 = arith.constant 0 : i32
    %c0_i32_1 = arith.constant 0 : i32
    return %arg1, %c0_i32, %c0_i32_0 : i32, i32, i32
  }
  func.func @transform_10(%arg0: i32, %arg1: i32) -> (i32, i32, i32) {
    %c0_i32 = arith.constant 0 : i32
    %c0_i32_0 = arith.constant 0 : i32
    %c0_i32_1 = arith.constant 0 : i32
    return %arg1, %c0_i32, %c0_i32_0 : i32, i32, i32
  }
  func.func @transform_11(%arg0: i32, %arg1: i32) -> (i32, i32, i32) {
    %c0_i32 = arith.constant 0 : i32
    %c0_i32_0 = arith.constant 0 : i32
    %c0_i32_1 = arith.constant 0 : i32
    return %arg1, %c0_i32, %c0_i32_0 : i32, i32, i32
  }
  func.func @transform_12(%arg0: i32, %arg1: i32) -> (i32, i32, i32) {
    %c0_i32 = arith.constant 0 : i32
    %c0_i32_0 = arith.constant 0 : i32
    %c0_i32_1 = arith.constant 0 : i32
    return %arg1, %c0_i32, %c0_i32_0 : i32, i32, i32
  }
  func.func @transform_13(%arg0: i32, %arg1: i32) -> (i32, i32, i32) {
    %c0_i32 = arith.constant 0 : i32
    %c0_i32_0 = arith.constant 0 : i32
    %c0_i32_1 = arith.constant 0 : i32
    return %arg1, %c0_i32, %c0_i32_0 : i32, i32, i32
  }
  func.func @transform_14(%arg0: i32, %arg1: i32) -> (i32, i32) {
    %c0_i32 = arith.constant 0 : i32
    %c0_i32_0 = arith.constant 0 : i32
    %c0_i32_1 = arith.constant 0 : i32
    return %c0_i32, %c0_i32_0 : i32, i32
  }
  func.func @transform_15(%arg0: i32, %arg1: i32) -> (i32, i32) {
    %c0_i32 = arith.constant 0 : i32
    %c0_i32_0 = arith.constant 0 : i32
    %c0_i32_1 = arith.constant 0 : i32
    return %c0_i32, %c0_i32_0 : i32, i32
  }
  func.func @transform_16(%arg0: i32, %arg1: i32) -> (i32, i32) {
    %c0_i32 = arith.constant 0 : i32
    %c0_i32_0 = arith.constant 0 : i32
    return %arg0, %c0_i32 : i32, i32
  }
}

</mosaic_0001>

<llo_original>
// kernel: tpu_custom_call.1
$region0: #{tpu_custom_call.1}
  #allocation0 [shape = 'u32[]', space=smem, size = 0x4, offset = 0x4, fixed_abs, tag = 'smem constant byte address 0x4 - core index']
  #allocation1 [shape = 'u32[72,128]{1,0:T(1,128)}', space=vmem, size = 0x9000, scoped, tag = 'internal scratch']
  %s0 = inlined_call_operand.vmem [shape: f32[16,32], index: 0, kind: input, shape index: {}]
  %s1 = inlined_call_operand.vmem [shape: f32[8,8], index: 1, kind: input, shape index: {}]
  %s2 = inlined_call_operand.vmem [shape: f32[2,1,32], index: 2, kind: input, shape index: {}]
  %s3 = inlined_call_operand.vmem [shape: f32[2,1,32], index: 3, kind: input, shape index: {}]
  %s4 = inlined_call_operand.vmem [shape: bf16[2,32,96], index: 4, kind: input, shape index: {}]
  %s5 = inlined_call_operand.vmem [shape: f32[2,1,96], index: 5, kind: input, shape index: {}]
  %s6 = inlined_call_operand.vmem [shape: bf16[2,4,8,32], index: 6, kind: input, shape index: {}]
  %s7 = inlined_call_operand.vmem [shape: f32[2,1,32], index: 7, kind: input, shape index: {}]
  %s8 = inlined_call_operand.vmem [shape: f32[2,1,32], index: 8, kind: input, shape index: {}]
  %s9 = inlined_call_operand.vmem [shape: f32[2,1,32], index: 9, kind: input, shape index: {}]
  %s10 = inlined_call_operand.vmem [shape: bf16[2,32,128], index: 10, kind: input, shape index: {}]
  %s11 = inlined_call_operand.vmem [shape: f32[2,1,128], index: 11, kind: input, shape index: {}]
  %s12 = inlined_call_operand.vmem [shape: bf16[2,128,32], index: 12, kind: input, shape index: {}]
  %s13 = inlined_call_operand.vmem [shape: f32[2,1,32], index: 13, kind: input, shape index: {}]
  %s14 = inlined_call_operand.vmem [shape: f32[1,32], index: 14, kind: input, shape index: {}]
  %s15 = inlined_call_operand.vmem [shape: f32[1,32], index: 15, kind: input, shape index: {}]
  %s16 = inlined_call_operand.hbm [shape: f32[16,32], index: 16, kind: output, shape index: {}]
  %s17 = sld [smem:[#allocation0]]
  $region105: #{tpu_custom_call.1} parent=0
    _
  %s19 = ssub.s32 1, %s17
  %s20 = scalar_select 0, %s19, %s17
  $region1: #{tpu_custom_call.1} parent=0
    #allocation2 [shape = 'u8[8192]{0}', space=vmem, size = 0x2000, scoped, tag = 'output window, operand 0']
    #allocation3 [shape = 's32[2]{0}', space=sflag, size = 0x8, scoped, tag = 'scoped memory for tpu_custom_call.1']
    %21 = vsyncpa [#allocation3], 0
    %s22 = scalar_lea.sflag [#allocation3], 1
    %23 = vsyncpa %s22, 0
    loop: start=0, step=1, limit=6
    $region2: #{tpu_custom_call.1} parent=1 // loop_pre_header
      _
    $region3: #{tpu_custom_call.1} parent=1 // loop_header
      %s25 = sphi 0, %s29
      %p26 = scmp.ge.s32.totalorder %s25, 6
      %s32 = sphi 0, %s44
      %s33 = sphi 0, %s40
      %s34 = sphi 0, %s32
      %s35 = sphi 0, %s33
      %s36 = sphi 0, %s34
      %s37 = sphi 0, %s35
      %s47 = sphi 0, %s49
      %s50 = sphi 0, %s47
      %s51 = sphi 0, %s50
      %s67 = sphi 0, %s51
      %s71 = sphi 0, %s71
      %s73 = sphi 0, %s71
      %s74 = sphi 0, %s73
      %s88 = sphi 0, %s74
      %s94 = sphi 0, %s96
      %s97 = sphi 0, %s94
      %s98 = sphi 0, %s97
      %s114 = sphi 0, %s98
      %s120 = sphi 0, %s122
      %s123 = sphi 0, %s120
      %s124 = sphi 0, %s123
      %s140 = sphi 0, %s124
      %s146 = sphi 0, %s148
      %s149 = sphi 0, %s146
      %s150 = sphi 0, %s149
      %s166 = sphi 0, %s150
      %s172 = sphi 0, %s174
      %s175 = sphi 0, %s172
      %s176 = sphi 0, %s175
      %s192 = sphi 0, %s176
      %s198 = sphi 0, %s200
      %s201 = sphi 0, %s198
      %s202 = sphi 0, %s201
      %s218 = sphi 0, %s202
      %s224 = sphi 0, %s226
      %s227 = sphi 0, %s224
      %s228 = sphi 0, %s227
      %s244 = sphi 0, %s228
      %s250 = sphi 0, %s252
      %s253 = sphi 0, %s250
      %s254 = sphi 0, %s253
      %s270 = sphi 0, %s254
      %s276 = sphi 0, %s278
      %s279 = sphi 0, %s276
      %s280 = sphi 0, %s279
      %s296 = sphi 0, %s280
      %s302 = sphi 0, %s304
      %s305 = sphi 0, %s302
      %s306 = sphi 0, %s305
      %s322 = sphi 0, %s306
      %s328 = sphi 0, %s330
      %s331 = sphi 0, %s328
      %s332 = sphi 0, %s331
      %s348 = sphi 0, %s332
      %s354 = sphi 0, %s356
      %s357 = sphi 0, %s354
      %s358 = sphi 0, %s357
      %s374 = sphi 0, %s358
      %s380 = sphi 0, %s382
      %s383 = sphi 0, %s380
      %s384 = sphi 0, %s383
      %s400 = sphi 0, %s384
      %s404 = sphi 0, %s404
      %s406 = sphi 0, %s404
      %s407 = sphi 0, %s406
      %s421 = sphi 0, %s407
      %s425 = sphi 0, %s425
      %s427 = sphi 0, %s425
      %s428 = sphi 0, %s427
      %s442 = sphi 0, %s428
      %s448 = sphi 0, %s450
      %s451 = sphi 0, %s448
      %s452 = sphi 0, %s451
      %s468 = sphi 0, %s452
    $region4: #{tpu_custom_call.1} parent=1 // loop_header_branch
      %28 = sbr.rel (%p26) target = $region8
    $region5: #{tpu_custom_call.1} parent=1 // loop_body
      %s30 = ssub.s32 %s25, 1
      %s31 = ssub.s32 %s25, 2
      %s38 = sadd.s32 1, %s33
      %p39 = scmp.ge.s32.totalorder %s38, 2
      %s40 = scalar_select %p39, 0, %s38
      %s41 = sadd.s32 1, %s32
      %s42 = scalar_select %p39, %s41, %s32
      %p43 = scmp.ge.s32.totalorder %s42, 2
      %s44 = scalar_select %p43, 0, %s42
      %s45 = ssub.s32 %s32, %s44
      %p46 = scmp.eq.s32.totalorder %s45, 0
      %s48 = sadd.s32 %s47, 1
      %s49 = scalar_select %p46, %s47, %s48
      %p52 = pneg %p46
      %p53 = scmp.eq.s32.totalorder %s25, 3
      %p54 = por %p52, %p53
      %p55 = scmp.ne.s32.totalorder %s47, %s50
      %p56 = scmp.eq.s32.totalorder %s25, 0
      %p57 = por %p55, %p56
      %p58 = scmp.ne.s32.totalorder %s47, %s50
      %p59 = scmp.eq.s32.totalorder %s30, 3
      %p60 = por %p58, %p59
      %p61 = scmp.ne.s32.totalorder %s50, %s51
      %p62 = scmp.eq.s32.totalorder %s30, 0
      %p63 = por %p61, %p62
      %p64 = scmp.ne.s32.totalorder %s50, %s51
      %p65 = scmp.eq.s32.totalorder %s31, 3
      %p66 = por %p64, %p65
      %p68 = scmp.ne.s32.totalorder %s51, %s67
      %p69 = scmp.eq.s32.totalorder %s31, 0
      %p70 = por %p68, %p69
      %s72 = sadd.s32 %s71, 1
      %p75 = scmp.eq.s32.totalorder %s25, 3
      %p76 = scmp.ne.s32.totalorder %s71, %s73
      %p77 = scmp.eq.s32.totalorder %s25, 0
      %p78 = por %p76, %p77
      %p79 = scmp.ne.s32.totalorder %s71, %s73
      %p80 = scmp.eq.s32.totalorder %s30, 3
      %p81 = por %p79, %p80
      %p82 = scmp.ne.s32.totalorder %s73, %s74
      %p83 = scmp.eq.s32.totalorder %s30, 0
      %p84 = por %p82, %p83
      %p85 = scmp.ne.s32.totalorder %s73, %s74
      %p86 = scmp.eq.s32.totalorder %s31, 3
      %p87 = por %p85, %p86
      %p89 = scmp.ne.s32.totalorder %s74, %s88
      %p90 = scmp.eq.s32.totalorder %s31, 0
      %p91 = por %p89, %p90
      %s92 = ssub.s32 %s33, %s40
      %p93 = scmp.eq.s32.totalorder %s92, 0
      %s95 = sadd.s32 %s94, 1
      %s96 = scalar_select %p93, %s94, %s95
      %p99 = pneg %p93
      %p100 = scmp.eq.s32.totalorder %s25, 3
      %p101 = por %p99, %p100
      %p102 = scmp.ne.s32.totalorder %s94, %s97
      %p103 = scmp.eq.s32.totalorder %s25, 0
      %p104 = por %p102, %p103
      %p105 = scmp.ne.s32.totalorder %s94, %s97
      %p106 = scmp.eq.s32.totalorder %s30, 3
      %p107 = por %p105, %p106
      %p108 = scmp.ne.s32.totalorder %s97, %s98
      %p109 = scmp.eq.s32.totalorder %s30, 0
      %p110 = por %p108, %p109
      %p111 = scmp.ne.s32.totalorder %s97, %s98
      %p112 = scmp.eq.s32.totalorder %s31, 3
      %p113 = por %p111, %p112
      %p115 = scmp.ne.s32.totalorder %s98, %s114
      %p116 = scmp.eq.s32.totalorder %s31, 0
      %p117 = por %p115, %p116
      %s118 = ssub.s32 %s33, %s40
      %p119 = scmp.eq.s32.totalorder %s118, 0
      %s121 = sadd.s32 %s120, 1
      %s122 = scalar_select %p119, %s120, %s121
      %p125 = pneg %p119
      %p126 = scmp.eq.s32.totalorder %s25, 3
      %p127 = por %p125, %p126
      %p128 = scmp.ne.s32.totalorder %s120, %s123
      %p129 = scmp.eq.s32.totalorder %s25, 0
      %p130 = por %p128, %p129
      %p131 = scmp.ne.s32.totalorder %s120, %s123
      %p132 = scmp.eq.s32.totalorder %s30, 3
      %p133 = por %p131, %p132
      %p134 = scmp.ne.s32.totalorder %s123, %s124
      %p135 = scmp.eq.s32.totalorder %s30, 0
      %p136 = por %p134, %p135
      %p137 = scmp.ne.s32.totalorder %s123, %s124
      %p138 = scmp.eq.s32.totalorder %s31, 3
      %p139 = por %p137, %p138
      %p141 = scmp.ne.s32.totalorder %s124, %s140
      %p142 = scmp.eq.s32.totalorder %s31, 0
      %p143 = por %p141, %p142
      %s144 = ssub.s32 %s33, %s40
      %p145 = scmp.eq.s32.totalorder %s144, 0
      %s147 = sadd.s32 %s146, 1
      %s148 = scalar_select %p145, %s146, %s147
      %p151 = pneg %p145
      %p152 = scmp.eq.s32.totalorder %s25, 3
      %p153 = por %p151, %p152
      %p154 = scmp.ne.s32.totalorder %s146, %s149
      %p155 = scmp.eq.s32.totalorder %s25, 0
      %p156 = por %p154, %p155
      %p157 = scmp.ne.s32.totalorder %s146, %s149
      %p158 = scmp.eq.s32.totalorder %s30, 3
      %p159 = por %p157, %p158
      %p160 = scmp.ne.s32.totalorder %s149, %s150
      %p161 = scmp.eq.s32.totalorder %s30, 0
      %p162 = por %p160, %p161
      %p163 = scmp.ne.s32.totalorder %s149, %s150
      %p164 = scmp.eq.s32.totalorder %s31, 3
      %p165 = por %p163, %p164
      %p167 = scmp.ne.s32.totalorder %s150, %s166
      %p168 = scmp.eq.s32.totalorder %s31, 0
      %p169 = por %p167, %p168
      %s170 = ssub.s32 %s33, %s40
      %p171 = scmp.eq.s32.totalorder %s170, 0
      %s173 = sadd.s32 %s172, 1
      %s174 = scalar_select %p171, %s172, %s173
      %p177 = pneg %p171
      %p178 = scmp.eq.s32.totalorder %s25, 3
      %p179 = por %p177, %p178
      %p180 = scmp.ne.s32.totalorder %s172, %s175
      %p181 = scmp.eq.s32.totalorder %s25, 0
      %p182 = por %p180, %p181
      %p183 = scmp.ne.s32.totalorder %s172, %s175
      %p184 = scmp.eq.s32.totalorder %s30, 3
      %p185 = por %p183, %p184
      %p186 = scmp.ne.s32.totalorder %s175, %s176
      %p187 = scmp.eq.s32.totalorder %s30, 0
      %p188 = por %p186, %p187
      %p189 = scmp.ne.s32.totalorder %s175, %s176
      %p190 = scmp.eq.s32.totalorder %s31, 3
      %p191 = por %p189, %p190
      %p193 = scmp.ne.s32.totalorder %s176, %s192
      %p194 = scmp.eq.s32.totalorder %s31, 0
      %p195 = por %p193, %p194
      %s196 = ssub.s32 %s33, %s40
      %p197 = scmp.eq.s32.totalorder %s196, 0
      %s199 = sadd.s32 %s198, 1
      %s200 = scalar_select %p197, %s198, %s199
      %p203 = pneg %p197
      %p204 = scmp.eq.s32.totalorder %s25, 3
      %p205 = por %p203, %p204
      %p206 = scmp.ne.s32.totalorder %s198, %s201
      %p207 = scmp.eq.s32.totalorder %s25, 0
      %p208 = por %p206, %p207
      %p209 = scmp.ne.s32.totalorder %s198, %s201
      %p210 = scmp.eq.s32.totalorder %s30, 3
      %p211 = por %p209, %p210
      %p212 = scmp.ne.s32.totalorder %s201, %s202
      %p213 = scmp.eq.s32.totalorder %s30, 0
      %p214 = por %p212, %p213
      %p215 = scmp.ne.s32.totalorder %s201, %s202
      %p216 = scmp.eq.s32.totalorder %s31, 3
      %p217 = por %p215, %p216
      %p219 = scmp.ne.s32.totalorder %s202, %s218
      %p220 = scmp.eq.s32.totalorder %s31, 0
      %p221 = por %p219, %p220
      %s222 = ssub.s32 %s33, %s40
      %p223 = scmp.eq.s32.totalorder %s222, 0
      %s225 = sadd.s32 %s224, 1
      %s226 = scalar_select %p223, %s224, %s225
      %p229 = pneg %p223
      %p230 = scmp.eq.s32.totalorder %s25, 3
      %p231 = por %p229, %p230
      %p232 = scmp.ne.s32.totalorder %s224, %s227
      %p233 = scmp.eq.s32.totalorder %s25, 0
      %p234 = por %p232, %p233
      %p235 = scmp.ne.s32.totalorder %s224, %s227
      %p236 = scmp.eq.s32.totalorder %s30, 3
      %p237 = por %p235, %p236
      %p238 = scmp.ne.s32.totalorder %s227, %s228
      %p239 = scmp.eq.s32.totalorder %s30, 0
      %p240 = por %p238, %p239
      %p241 = scmp.ne.s32.totalorder %s227, %s228
      %p242 = scmp.eq.s32.totalorder %s31, 3
      %p243 = por %p241, %p242
      %p245 = scmp.ne.s32.totalorder %s228, %s244
      %p246 = scmp.eq.s32.totalorder %s31, 0
      %p247 = por %p245, %p246
      %s248 = ssub.s32 %s33, %s40
      %p249 = scmp.eq.s32.totalorder %s248, 0
      %s251 = sadd.s32 %s250, 1
      %s252 = scalar_select %p249, %s250, %s251
      %p255 = pneg %p249
      %p256 = scmp.eq.s32.totalorder %s25, 3
      %p257 = por %p255, %p256
      %p258 = scmp.ne.s32.totalorder %s250, %s253
      %p259 = scmp.eq.s32.totalorder %s25, 0
      %p260 = por %p258, %p259
      %p261 = scmp.ne.s32.totalorder %s250, %s253
      %p262 = scmp.eq.s32.totalorder %s30, 3
      %p263 = por %p261, %p262
      %p264 = scmp.ne.s32.totalorder %s253, %s254
      %p265 = scmp.eq.s32.totalorder %s30, 0
      %p266 = por %p264, %p265
      %p267 = scmp.ne.s32.totalorder %s253, %s254
      %p268 = scmp.eq.s32.totalorder %s31, 3
      %p269 = por %p267, %p268
      %p271 = scmp.ne.s32.totalorder %s254, %s270
      %p272 = scmp.eq.s32.totalorder %s31, 0
      %p273 = por %p271, %p272
      %s274 = ssub.s32 %s33, %s40
      %p275 = scmp.eq.s32.totalorder %s274, 0
      %s277 = sadd.s32 %s276, 1
      %s278 = scalar_select %p275, %s276, %s277
      %p281 = pneg %p275
      %p282 = scmp.eq.s32.totalorder %s25, 3
      %p283 = por %p281, %p282
      %p284 = scmp.ne.s32.totalorder %s276, %s279
      %p285 = scmp.eq.s32.totalorder %s25, 0
      %p286 = por %p284, %p285
      %p287 = scmp.ne.s32.totalorder %s276, %s279
      %p288 = scmp.eq.s32.totalorder %s30, 3
      %p289 = por %p287, %p288
      %p290 = scmp.ne.s32.totalorder %s279, %s280
      %p291 = scmp.eq.s32.totalorder %s30, 0
      %p292 = por %p290, %p291
      %p293 = scmp.ne.s32.totalorder %s279, %s280
      %p294 = scmp.eq.s32.totalorder %s31, 3
      %p295 = por %p293, %p294
      %p297 = scmp.ne.s32.totalorder %s280, %s296
      %p298 = scmp.eq.s32.totalorder %s31, 0
      %p299 = por %p297, %p298
      %s300 = ssub.s32 %s33, %s40
      %p301 = scmp.eq.s32.totalorder %s300, 0
      %s303 = sadd.s32 %s302, 1
      %s304 = scalar_select %p301, %s302, %s303
      %p307 = pneg %p301
      %p308 = scmp.eq.s32.totalorder %s25, 3
      %p309 = por %p307, %p308
      %p310 = scmp.ne.s32.totalorder %s302, %s305
      %p311 = scmp.eq.s32.totalorder %s25, 0
      %p312 = por %p310, %p311
      %p313 = scmp.ne.s32.totalorder %s302, %s305
      %p314 = scmp.eq.s32.totalorder %s30, 3
      %p315 = por %p313, %p314
      %p316 = scmp.ne.s32.totalorder %s305, %s306
      %p317 = scmp.eq.s32.totalorder %s30, 0
      %p318 = por %p316, %p317
      %p319 = scmp.ne.s32.totalorder %s305, %s306
      %p320 = scmp.eq.s32.totalorder %s31, 3
      %p321 = por %p319, %p320
      %p323 = scmp.ne.s32.totalorder %s306, %s322
      %p324 = scmp.eq.s32.totalorder %s31, 0
      %p325 = por %p323, %p324
      %s326 = ssub.s32 %s33, %s40
      %p327 = scmp.eq.s32.totalorder %s326, 0
      %s329 = sadd.s32 %s328, 1
      %s330 = scalar_select %p327, %s328, %s329
      %p333 = pneg %p327
      %p334 = scmp.eq.s32.totalorder %s25, 3
      %p335 = por %p333, %p334
      %p336 = scmp.ne.s32.totalorder %s328, %s331
      %p337 = scmp.eq.s32.totalorder %s25, 0
      %p338 = por %p336, %p337
      %p339 = scmp.ne.s32.totalorder %s328, %s331
      %p340 = scmp.eq.s32.totalorder %s30, 3
      %p341 = por %p339, %p340
      %p342 = scmp.ne.s32.totalorder %s331, %s332
      %p343 = scmp.eq.s32.totalorder %s30, 0
      %p344 = por %p342, %p343
      %p345 = scmp.ne.s32.totalorder %s331, %s332
      %p346 = scmp.eq.s32.totalorder %s31, 3
      %p347 = por %p345, %p346
      %p349 = scmp.ne.s32.totalorder %s332, %s348
      %p350 = scmp.eq.s32.totalorder %s31, 0
      %p351 = por %p349, %p350
      %s352 = ssub.s32 %s33, %s40
      %p353 = scmp.eq.s32.totalorder %s352, 0
      %s355 = sadd.s32 %s354, 1
      %s356 = scalar_select %p353, %s354, %s355
      %p359 = pneg %p353
      %p360 = scmp.eq.s32.totalorder %s25, 3
      %p361 = por %p359, %p360
      %p362 = scmp.ne.s32.totalorder %s354, %s357
      %p363 = scmp.eq.s32.totalorder %s25, 0
      %p364 = por %p362, %p363
      %p365 = scmp.ne.s32.totalorder %s354, %s357
      %p366 = scmp.eq.s32.totalorder %s30, 3
      %p367 = por %p365, %p366
      %p368 = scmp.ne.s32.totalorder %s357, %s358
      %p369 = scmp.eq.s32.totalorder %s30, 0
      %p370 = por %p368, %p369
      %p371 = scmp.ne.s32.totalorder %s357, %s358
      %p372 = scmp.eq.s32.totalorder %s31, 3
      %p373 = por %p371, %p372
      %p375 = scmp.ne.s32.totalorder %s358, %s374
      %p376 = scmp.eq.s32.totalorder %s31, 0
      %p377 = por %p375, %p376
      %s378 = ssub.s32 %s33, %s40
      %p379 = scmp.eq.s32.totalorder %s378, 0
      %s381 = sadd.s32 %s380, 1
      %s382 = scalar_select %p379, %s380, %s381
      %p385 = pneg %p379
      %p386 = scmp.eq.s32.totalorder %s25, 3
      %p387 = por %p385, %p386
      %p388 = scmp.ne.s32.totalorder %s380, %s383
      %p389 = scmp.eq.s32.totalorder %s25, 0
      %p390 = por %p388, %p389
      %p391 = scmp.ne.s32.totalorder %s380, %s383
      %p392 = scmp.eq.s32.totalorder %s30, 3
      %p393 = por %p391, %p392
      %p394 = scmp.ne.s32.totalorder %s383, %s384
      %p395 = scmp.eq.s32.totalorder %s30, 0
      %p396 = por %p394, %p395
      %p397 = scmp.ne.s32.totalorder %s383, %s384
      %p398 = scmp.eq.s32.totalorder %s31, 3
      %p399 = por %p397, %p398
      %p401 = scmp.ne.s32.totalorder %s384, %s400
      %p402 = scmp.eq.s32.totalorder %s31, 0
      %p403 = por %p401, %p402
      %s405 = sadd.s32 %s404, 1
      %p408 = scmp.eq.s32.totalorder %s25, 3
      %p409 = scmp.ne.s32.totalorder %s404, %s406
      %p410 = scmp.eq.s32.totalorder %s25, 0
      %p411 = por %p409, %p410
      %p412 = scmp.ne.s32.totalorder %s404, %s406
      %p413 = scmp.eq.s32.totalorder %s30, 3
      %p414 = por %p412, %p413
      %p415 = scmp.ne.s32.totalorder %s406, %s407
      %p416 = scmp.eq.s32.totalorder %s30, 0
      %p417 = por %p415, %p416
      %p418 = scmp.ne.s32.totalorder %s406, %s407
      %p419 = scmp.eq.s32.totalorder %s31, 3
      %p420 = por %p418, %p419
      %p422 = scmp.ne.s32.totalorder %s407, %s421
      %p423 = scmp.eq.s32.totalorder %s31, 0
      %p424 = por %p422, %p423
      %s426 = sadd.s32 %s425, 1
      %p429 = scmp.eq.s32.totalorder %s25, 3
      %p430 = scmp.ne.s32.totalorder %s425, %s427
      %p431 = scmp.eq.s32.totalorder %s25, 0
      %p432 = por %p430, %p431
      %p433 = scmp.ne.s32.totalorder %s425, %s427
      %p434 = scmp.eq.s32.totalorder %s30, 3
      %p435 = por %p433, %p434
      %p436 = scmp.ne.s32.totalorder %s427, %s428
      %p437 = scmp.eq.s32.totalorder %s30, 0
      %p438 = por %p436, %p437
      %p439 = scmp.ne.s32.totalorder %s427, %s428
      %p440 = scmp.eq.s32.totalorder %s31, 3
      %p441 = por %p439, %p440
      %p443 = scmp.ne.s32.totalorder %s428, %s442
      %p444 = scmp.eq.s32.totalorder %s31, 0
      %p445 = por %p443, %p444
      %s446 = ssub.s32 %s32, %s44
      %p447 = scmp.eq.s32.totalorder %s446, 0
      %s449 = sadd.s32 %s448, 1
      %s450 = scalar_select %p447, %s448, %s449
      %p453 = pneg %p447
      %p454 = scmp.eq.s32.totalorder %s25, 3
      %p455 = por %p453, %p454
      %p456 = scmp.ne.s32.totalorder %s448, %s451
      %p457 = scmp.eq.s32.totalorder %s25, 0
      %p458 = por %p456, %p457
      %p459 = scmp.ne.s32.totalorder %s448, %s451
      %p460 = scmp.eq.s32.totalorder %s30, 3
      %p461 = por %p459, %p460
      %p462 = scmp.ne.s32.totalorder %s451, %s452
      %p463 = scmp.eq.s32.totalorder %s30, 0
      %p464 = por %p462, %p463
      %p465 = scmp.ne.s32.totalorder %s451, %s452
      %p466 = scmp.eq.s32.totalorder %s31, 3
      %p467 = por %p465, %p466
      %p469 = scmp.ne.s32.totalorder %s452, %s468
      %p470 = scmp.eq.s32.totalorder %s31, 0
      %p471 = por %p469, %p470
      %p472 = scmp.le.s32.totalorder 1, %s25
      %p473 = scmp.lt.s32.totalorder %s25, 5
      %p474 = pnand %p472, %p473
      %p475 = pneg %p474
      // Predicated region
      $region9: #{tpu_custom_call.1} parent=5 // pred_check
        _
      $region10: #{tpu_custom_call.1} parent=5 // pred_check_branch
        %477 = sbr.rel (%p474) target = $region12
      $region11: #{tpu_custom_call.1} parent=5 // pred_region
        %s478 = ssub.s32 %s25, 1
        // Predicated region
        $region13: #{tpu_custom_call.1} parent=11 // pred_check
          %p479 = pneg %p84
        $region14: #{tpu_custom_call.1} parent=11 // pred_check_branch
          %481 = sbr.rel (%p479) target = $region16
        $region15: #{tpu_custom_call.1} parent=11 // pred_region
          _
        $region16: #{tpu_custom_call.1} parent=11 // pred_fallthru
          _
        // Predicated region
        $region17: #{tpu_custom_call.1} parent=11 // pred_check
          %p482 = pneg %p417
        $region18: #{tpu_custom_call.1} parent=11 // pred_check_branch
          %484 = sbr.rel (%p482) target = $region20
        $region19: #{tpu_custom_call.1} parent=11 // pred_region
          _
        $region20: #{tpu_custom_call.1} parent=11 // pred_fallthru
          _
        // Predicated region
        $region21: #{tpu_custom_call.1} parent=11 // pred_check
          %p485 = pneg %p438
        $region22: #{tpu_custom_call.1} parent=11 // pred_check_branch
          %487 = sbr.rel (%p485) target = $region24
        $region23: #{tpu_custom_call.1} parent=11 // pred_region
          _
        $region24: #{tpu_custom_call.1} parent=11 // pred_fallthru
          _
      $region12: #{tpu_custom_call.1} parent=5 // pred_fallthru
        _
      %p488 = scmp.lt.s32.totalorder %s25, 4
      // Predicated region
      $region25: #{tpu_custom_call.1} parent=5 // pred_check
        %p489 = pneg %p488
      $region26: #{tpu_custom_call.1} parent=5 // pred_check_branch
        %491 = sbr.rel (%p489) target = $region28
      $region27: #{tpu_custom_call.1} parent=5 // pred_region
        // Predicated region
        $region29: #{tpu_custom_call.1} parent=27 // pred_check
          %p492 = pneg %p57
        $region30: #{tpu_custom_call.1} parent=27 // pred_check_branch
          %494 = sbr.rel (%p492) target = $region32
        $region31: #{tpu_custom_call.1} parent=27 // pred_region
          %p495 = scmp.lt.s32.totalorder %s32, 1
          %s496 = scalar_select %p495, %s32, 1
          %s497 = smul.addr %s496, 8
          %s498 = scalar_lea.vmem %s0, %s497
        $region32: #{tpu_custom_call.1} parent=27 // pred_fallthru
          _
        // Predicated region
        $region33: #{tpu_custom_call.1} parent=27 // pred_check
          %p499 = pneg %p104
        $region34: #{tpu_custom_call.1} parent=27 // pred_check_branch
          %501 = sbr.rel (%p499) target = $region36
        $region35: #{tpu_custom_call.1} parent=27 // pred_region
          %p502 = scmp.lt.s32.totalorder %s33, 1
          %s503 = scalar_select %p502, %s33, 1
          %s504 = scalar_lea.vmem %s2, %s503
        $region36: #{tpu_custom_call.1} parent=27 // pred_fallthru
          _
        // Predicated region
        $region37: #{tpu_custom_call.1} parent=27 // pred_check
          %p505 = pneg %p130
        $region38: #{tpu_custom_call.1} parent=27 // pred_check_branch
          %507 = sbr.rel (%p505) target = $region40
        $region39: #{tpu_custom_call.1} parent=27 // pred_region
          %p508 = scmp.lt.s32.totalorder %s33, 1
          %s509 = scalar_select %p508, %s33, 1
          %s510 = scalar_lea.vmem %s3, %s509
        $region40: #{tpu_custom_call.1} parent=27 // pred_fallthru
          _
        // Predicated region
        $region41: #{tpu_custom_call.1} parent=27 // pred_check
          %p511 = pneg %p156
        $region42: #{tpu_custom_call.1} parent=27 // pred_check_branch
          %513 = sbr.rel (%p511) target = $region44
        $region43: #{tpu_custom_call.1} parent=27 // pred_region
          %p514 = scmp.lt.s32.totalorder %s33, 1
          %s515 = scalar_select %p514, %s33, 1
          %s516 = smul.addr %s515, 4
          %s517 = smul.addr %s516, 4
          %s518 = scalar_lea.vmem %s4, %s517
        $region44: #{tpu_custom_call.1} parent=27 // pred_fallthru
          _
        // Predicated region
        $region45: #{tpu_custom_call.1} parent=27 // pred_check
          %p519 = pneg %p182
        $region46: #{tpu_custom_call.1} parent=27 // pred_check_branch
          %521 = sbr.rel (%p519) target = $region48
        $region47: #{tpu_custom_call.1} parent=27 // pred_region
          %p522 = scmp.lt.s32.totalorder %s33, 1
          %s523 = scalar_select %p522, %s33, 1
          %s524 = scalar_lea.vmem %s5, %s523
        $region48: #{tpu_custom_call.1} parent=27 // pred_fallthru
          _
        // Predicated region
        $region49: #{tpu_custom_call.1} parent=27 // pred_check
          %p525 = pneg %p208
        $region50: #{tpu_custom_call.1} parent=27 // pred_check_branch
          %527 = sbr.rel (%p525) target = $region52
        $region51: #{tpu_custom_call.1} parent=27 // pred_region
          %p528 = scmp.lt.s32.totalorder %s33, 1
          %s529 = scalar_select %p528, %s33, 1
          %s530 = smul.addr %s529, 4
          %s531 = smul.addr %s530, 4
          %s532 = scalar_lea.vmem %s6, %s531
        $region52: #{tpu_custom_call.1} parent=27 // pred_fallthru
          _
        // Predicated region
        $region53: #{tpu_custom_call.1} parent=27 // pred_check
          %p533 = pneg %p234
        $region54: #{tpu_custom_call.1} parent=27 // pred_check_branch
          %535 = sbr.rel (%p533) target = $region56
        $region55: #{tpu_custom_call.1} parent=27 // pred_region
          %p536 = scmp.lt.s32.totalorder %s33, 1
          %s537 = scalar_select %p536, %s33, 1
          %s538 = scalar_lea.vmem %s7, %s537
        $region56: #{tpu_custom_call.1} parent=27 // pred_fallthru
          _
        // Predicated region
        $region57: #{tpu_custom_call.1} parent=27 // pred_check
          %p539 = pneg %p260
        $region58: #{tpu_custom_call.1} parent=27 // pred_check_branch
          %541 = sbr.rel (%p539) target = $region60
        $region59: #{tpu_custom_call.1} parent=27 // pred_region
          %p542 = scmp.lt.s32.totalorder %s33, 1
          %s543 = scalar_select %p542, %s33, 1
          %s544 = scalar_lea.vmem %s8, %s543
        $region60: #{tpu_custom_call.1} parent=27 // pred_fallthru
          _
        // Predicated region
        $region61: #{tpu_custom_call.1} parent=27 // pred_check
          %p545 = pneg %p286
        $region62: #{tpu_custom_call.1} parent=27 // pred_check_branch
          %547 = sbr.rel (%p545) target = $region64
        $region63: #{tpu_custom_call.1} parent=27 // pred_region
          %p548 = scmp.lt.s32.totalorder %s33, 1
          %s549 = scalar_select %p548, %s33, 1
          %s550 = scalar_lea.vmem %s9, %s549
        $region64: #{tpu_custom_call.1} parent=27 // pred_fallthru
          _
        // Predicated region
        $region65: #{tpu_custom_call.1} parent=27 // pred_check
          %p551 = pneg %p312
        $region66: #{tpu_custom_call.1} parent=27 // pred_check_branch
          %553 = sbr.rel (%p551) target = $region68
        $region67: #{tpu_custom_call.1} parent=27 // pred_region
          %p554 = scmp.lt.s32.totalorder %s33, 1
          %s555 = scalar_select %p554, %s33, 1
          %s556 = smul.addr %s555, 4
          %s557 = smul.addr %s556, 4
          %s558 = scalar_lea.vmem %s10, %s557
        $region68: #{tpu_custom_call.1} parent=27 // pred_fallthru
          _
        // Predicated region
        $region69: #{tpu_custom_call.1} parent=27 // pred_check
          %p559 = pneg %p338
        $region70: #{tpu_custom_call.1} parent=27 // pred_check_branch
          %561 = sbr.rel (%p559) target = $region72
        $region71: #{tpu_custom_call.1} parent=27 // pred_region
          %p562 = scmp.lt.s32.totalorder %s33, 1
          %s563 = scalar_select %p562, %s33, 1
          %s564 = scalar_lea.vmem %s11, %s563
        $region72: #{tpu_custom_call.1} parent=27 // pred_fallthru
          _
        // Predicated region
        $region73: #{tpu_custom_call.1} parent=27 // pred_check
          %p565 = pneg %p364
        $region74: #{tpu_custom_call.1} parent=27 // pred_check_branch
          %567 = sbr.rel (%p565) target = $region76
        $region75: #{tpu_custom_call.1} parent=27 // pred_region
          %p568 = scmp.lt.s32.totalorder %s33, 1
          %s569 = scalar_select %p568, %s33, 1
          %s570 = smul.addr %s569, 16
          %s571 = smul.addr %s570, 4
          %s572 = scalar_lea.vmem %s12, %s571
        $region76: #{tpu_custom_call.1} parent=27 // pred_fallthru
          _
        // Predicated region
        $region77: #{tpu_custom_call.1} parent=27 // pred_check
          %p573 = pneg %p390
        $region78: #{tpu_custom_call.1} parent=27 // pred_check_branch
          %575 = sbr.rel (%p573) target = $region80
        $region79: #{tpu_custom_call.1} parent=27 // pred_region
          %p576 = scmp.lt.s32.totalorder %s33, 1
          %s577 = scalar_select %p576, %s33, 1
          %s578 = scalar_lea.vmem %s13, %s577
        $region80: #{tpu_custom_call.1} parent=27 // pred_fallthru
          _
      $region28: #{tpu_custom_call.1} parent=5 // pred_fallthru
        _
      %p579 = scmp.le.s32.totalorder 1, %s25
      %p580 = scmp.lt.s32.totalorder %s25, 5
      %p581 = pnand %p579, %p580
      %p582 = pneg %p581
      // Predicated region
      $region81: #{tpu_custom_call.1} parent=5 // pred_check
        _
      $region82: #{tpu_custom_call.1} parent=5 // pred_check_branch
        %584 = sbr.rel (%p581) target = $region84
      $region83: #{tpu_custom_call.1} parent=5 // pred_region
        %s585 = ssub.s32 %s25, 1
        %p586 = scmp.lt.s32.totalorder %s34, 1
        %s587 = scalar_select %p586, %s34, 1
        %s588 = smul.addr %s587, 8
        %s589 = scalar_lea.vmem %s0, %s588
        %p590 = pneg %p63
        %p591 = pneg %p60
        %p592 = pneg %p84
        %p593 = pneg %p81
        %p594 = scmp.lt.s32.totalorder %s35, 1
        %s595 = scalar_select %p594, %s35, 1
        %s596 = scalar_lea.vmem %s2, %s595
        %p597 = pneg %p110
        %p598 = pneg %p107
        %p599 = scmp.lt.s32.totalorder %s35, 1
        %s600 = scalar_select %p599, %s35, 1
        %s601 = scalar_lea.vmem %s3, %s600
        %p602 = pneg %p136
        %p603 = pneg %p133
        %p604 = scmp.lt.s32.totalorder %s35, 1
        %s605 = scalar_select %p604, %s35, 1
        %s606 = smul.addr %s605, 4
        %s607 = smul.addr %s606, 4
        %s608 = scalar_lea.vmem %s4, %s607
        %p609 = pneg %p162
        %p610 = pneg %p159
        %p611 = scmp.lt.s32.totalorder %s35, 1
        %s612 = scalar_select %p611, %s35, 1
        %s613 = scalar_lea.vmem %s5, %s612
        %p614 = pneg %p188
        %p615 = pneg %p185
        %p616 = scmp.lt.s32.totalorder %s35, 1
        %s617 = scalar_select %p616, %s35, 1
        %s618 = smul.addr %s617, 4
        %s619 = smul.addr %s618, 4
        %s620 = scalar_lea.vmem %s6, %s619
        %p621 = pneg %p214
        %p622 = pneg %p211
        %p623 = scmp.lt.s32.totalorder %s35, 1
        %s624 = scalar_select %p623, %s35, 1
        %s625 = scalar_lea.vmem %s7, %s624
        %p626 = pneg %p240
        %p627 = pneg %p237
        %p628 = scmp.lt.s32.totalorder %s35, 1
        %s629 = scalar_select %p628, %s35, 1
        %s630 = scalar_lea.vmem %s8, %s629
        %p631 = pneg %p266
        %p632 = pneg %p263
        %p633 = scmp.lt.s32.totalorder %s35, 1
        %s634 = scalar_select %p633, %s35, 1
        %s635 = scalar_lea.vmem %s9, %s634
        %p636 = pneg %p292
        %p637 = pneg %p289
        %p638 = scmp.lt.s32.totalorder %s35, 1
        %s639 = scalar_select %p638, %s35, 1
        %s640 = smul.addr %s639, 4
        %s641 = smul.addr %s640, 4
        %s642 = scalar_lea.vmem %s10, %s641
        %p643 = pneg %p318
        %p644 = pneg %p315
        %p645 = scmp.lt.s32.totalorder %s35, 1
        %s646 = scalar_select %p645, %s35, 1
        %s647 = scalar_lea.vmem %s11, %s646
        %p648 = pneg %p344
        %p649 = pneg %p341
        %p650 = scmp.lt.s32.totalorder %s35, 1
        %s651 = scalar_select %p650, %s35, 1
        %s652 = smul.addr %s651, 16
        %s653 = smul.addr %s652, 4
        %s654 = scalar_lea.vmem %s12, %s653
        %p655 = pneg %p370
        %p656 = pneg %p367
        %p657 = scmp.lt.s32.totalorder %s35, 1
        %s658 = scalar_select %p657, %s35, 1
        %s659 = scalar_lea.vmem %s13, %s658
        %p660 = pneg %p396
        %p661 = pneg %p393
        %p662 = pneg %p417
        %p663 = pneg %p414
        %p664 = pneg %p438
        %p665 = pneg %p435
        %p666 = pneg %p464
        %p667 = pneg %p461
        %s668 = sand.u32 %s451, 1
        %s669 = scalar_lea.sflag [#allocation3], %s668
        %s670 = sand.u32 %s451, 1
        %s671 = smul.addr %s670, 8
        %s672 = scalar_lea.vmem [#allocation2], %s671
        %p673 = scmp.lt.s32.totalorder %s34, 1
        %s674 = scalar_select %p673, %s34, 1
        %s675 = smul.addr %s674, 8
        %s676 = scalar_lea.vmem %s0, %s675
        %p677 = scmp.lt.s32.totalorder %s35, 1
        %s678 = scalar_select %p677, %s35, 1
        %s679 = scalar_lea.vmem %s2, %s678
        %p680 = scmp.lt.s32.totalorder %s35, 1
        %s681 = scalar_select %p680, %s35, 1
        %s682 = scalar_lea.vmem %s3, %s681
        %p683 = scmp.lt.s32.totalorder %s35, 1
        %s684 = scalar_select %p683, %s35, 1
        %s685 = smul.addr %s684, 4
        %s686 = smul.addr %s685, 4
        %s687 = scalar_lea.vmem %s4, %s686
        %p688 = scmp.lt.s32.totalorder %s35, 1
        %s689 = scalar_select %p688, %s35, 1
        %s690 = scalar_lea.vmem %s5, %s689
        %p691 = scmp.lt.s32.totalorder %s35, 1
        %s692 = scalar_select %p691, %s35, 1
        %s693 = smul.addr %s692, 4
        %s694 = smul.addr %s693, 4
        %s695 = scalar_lea.vmem %s6, %s694
        %p696 = scmp.lt.s32.totalorder %s35, 1
        %s697 = scalar_select %p696, %s35, 1
        %s698 = scalar_lea.vmem %s7, %s697
        %p699 = scmp.lt.s32.totalorder %s35, 1
        %s700 = scalar_select %p699, %s35, 1
        %s701 = scalar_lea.vmem %s8, %s700
        %p702 = scmp.lt.s32.totalorder %s35, 1
        %s703 = scalar_select %p702, %s35, 1
        %s704 = scalar_lea.vmem %s9, %s703
        %p705 = scmp.lt.s32.totalorder %s35, 1
        %s706 = scalar_select %p705, %s35, 1
        %s707 = smul.addr %s706, 4
        %s708 = smul.addr %s707, 4
        %s709 = scalar_lea.vmem %s10, %s708
        %p710 = scmp.lt.s32.totalorder %s35, 1
        %s711 = scalar_select %p710, %s35, 1
        %s712 = scalar_lea.vmem %s11, %s711
        %p713 = scmp.lt.s32.totalorder %s35, 1
        %s714 = scalar_select %p713, %s35, 1
        %s715 = smul.addr %s714, 16
        %s716 = smul.addr %s715, 4
        %s717 = scalar_lea.vmem %s12, %s716
        %p718 = scmp.lt.s32.totalorder %s35, 1
        %s719 = scalar_select %p718, %s35, 1
        %s720 = scalar_lea.vmem %s13, %s719
        %p722 = scmp.eq.s32.totalorder %s35, 0
        // Predicated region
        $region85: #{tpu_custom_call.1} parent=83 // pred_check
          %p723 = pneg %p722
        $region86: #{tpu_custom_call.1} parent=83 // pred_check_branch
          %725 = sbr.rel (%p723) target = $region88
        $region87: #{tpu_custom_call.1} parent=83 // pred_region
          %v726 = vld [vmem:[%s676] sm:$0xff]
          %vm727 = vcmask 261120
          %728 = vst.msk [vmem:[%s672] sm:$0xff] %vm727, %v726
        $region88: #{tpu_custom_call.1} parent=83 // pred_fallthru
          _
        %v729 = vld [vmem:[%s672] sm:$0xff]
        %v730 = vld [vmem:[%s1] sm:$0xff]
        %v731 = vld [vmem:[%s679] sm:$0x1]
        %v732 = vld [vmem:[%s682] sm:$0x1]
        %v733 = vld [vmem:[%s687] sm:$0xf]
        %v734 = vld [vmem:[%s687 + $0x4] sm:$0xf]
        %v735 = vld [vmem:[%s687 + $0x8] sm:$0xf]
        %v736 = vld [vmem:[%s687 + $0xc] sm:$0xf]
        %v737 = vld [vmem:[%s690] sm:$0x1]
        %v738 = vld [vmem:[%s695] sm:$0xf]
        %v739 = vld [vmem:[%s695 + $0x4] sm:$0xf]
        %v740 = vld [vmem:[%s695 + $0x8] sm:$0xf]
        %v741 = vld [vmem:[%s695 + $0xc] sm:$0xf]
        %v742 = vld [vmem:[%s698] sm:$0x1]
        %v743 = vld [vmem:[%s701] sm:$0x1]
        %v744 = vld [vmem:[%s704] sm:$0x1]
        %v745 = vld [vmem:[%s709] sm:$0xf]
        %v746 = vld [vmem:[%s709 + $0x4] sm:$0xf]
        %v747 = vld [vmem:[%s709 + $0x8] sm:$0xf]
        %v748 = vld [vmem:[%s709 + $0xc] sm:$0xf]
        %v749 = vld [vmem:[%s712] sm:$0x1]
        %v750 = vld [vmem:[%s717] sm:$0xf]
        %v751 = vld [vmem:[%s717 + $0x4] sm:$0xf]
        %v752 = vld [vmem:[%s717 + $0x8] sm:$0xf]
        %v753 = vld [vmem:[%s717 + $0xc] sm:$0xf]
        %v754 = vld [vmem:[%s717 + $0x10] sm:$0xf]
        %v755 = vld [vmem:[%s717 + $0x14] sm:$0xf]
        %v756 = vld [vmem:[%s717 + $0x18] sm:$0xf]
        %v757 = vld [vmem:[%s717 + $0x1c] sm:$0xf]
        %v758 = vld [vmem:[%s717 + $0x20] sm:$0xf]
        %v759 = vld [vmem:[%s717 + $0x24] sm:$0xf]
        %v760 = vld [vmem:[%s717 + $0x28] sm:$0xf]
        %v761 = vld [vmem:[%s717 + $0x2c] sm:$0xf]
        %v762 = vld [vmem:[%s717 + $0x30] sm:$0xf]
        %v763 = vld [vmem:[%s717 + $0x34] sm:$0xf]
        %v764 = vld [vmem:[%s717 + $0x38] sm:$0xf]
        %v765 = vld [vmem:[%s717 + $0x3c] sm:$0xf]
        %v766 = vld [vmem:[%s720] sm:$0x1]
        %vm767 = vcmask 261120
        %v768 = vsel %vm767, %v729, 0.0
        %769 = vadd.xlane.f32.xlu0 %v768
        %v770 = vpop.xlane.xlu0 %769
        %v771 = vrcp.pop 32.0
        %v772 = vmul.f32 32.0, %v771
        %v773 = vsub.f32 1.0, %v772
        %v774 = vmul.f32 %v771, %v773
        %v775 = vadd.f32 %v771, %v774
        %vm776 = vweird.f32 %v771
        %v777 = vsel %vm776, %v771, %v775
        %v778 = vmul.f32 %v770, %v777
        %v779 = vsub.f32 %v729, %v778
        %v780 = vmul.f32 %v779, %v779
        %v781 = vsel %vm767, %v780, 0.0
        %782 = vadd.xlane.f32.xlu0 %v781
        %v783 = vpop.xlane.xlu0 %782
        %v784 = vmul.f32 %v783, %v777
        %v785 = vadd.f32 %v784, 1e-05
        %v786 = vrsqrt.pop %v785
        %v787 = vmul.f32 %v786, %v785
        %v788 = vmul.f32 %v787, %v786
        %v789 = vmul.f32 0.5, %v788
        %v790 = vsub.f32 1.5, %v789
        %v791 = vmul.f32 %v786, %v790
        %vm792 = vweird.f32 %v785
        %vm793 = vweird.f32 %v786
        %vm794 = vmor %vm792, %vm793
        %v795 = vsel %vm794, %v786, %v791
        %v796 = vmul.f32 %v779, %v795
        %v798 = vperm.slane %v731, 0
        %v800 = vmul.f32 %v796, %v798
        %v802 = vperm.slane %v732, 0
        %v804 = vadd.f32 %v800, %v802
        %v805 = vpack.c.bf16 %v804, %v804
        %v807 = vperm.slane %v737, 0
        %v813 = vunpack.c.l.b16 %v733
        %v814 = vunpack.c.l.b16 %v734
        %v815 = vunpack.c.l.b16 %v735
        %v816 = vunpack.c.l.b16 %v736
        %v817 = vpack.c.b16 %v814, %v813
        %v818 = vpack.c.b16 %v816, %v815
        %v822 = vsel %vm767, %v805, 0
        %824 = vmatpush.bf16.msra.mxu0 0
        %825 = vmatpush.bf16.msra.mxu0 0
        %826 = vmatpush.bf16.msra.mxu0 0
        %827 = vmatpush.bf16.msra.mxu0 0
        %828 = vmatpush.bf16.msra.mxu0 0
        %829 = vmatpush.bf16.msra.mxu0 0
        %830 = vmatpush.bf16.msra.mxu0 %v818
        %831 = vmatpush.bf16.msra.mxu0 %v817
        %832 = vmatmul.bf16.gmra.mxu0 %v822
        %v833 = vpop.f32.mrf.mxu0
        %v834 = vadd.f32 %v807, %v833
        %v835 = vpop.f32.mrf.mxu0
        %836 = vdwg.mxu0
        %v837 = vpack.c.bf16 %v834, %v834
        %v839 = vunpack.c.l.b16 %v837
        %v840 = vpack.c.b16 %v839, %v839
        %841 = vrot.lane.b32.xlu0 %v840, 96
        %v842 = vpop.permute.xlu0 %841
        %vm843 = vcmask 64512
        %v845 = vsel %vm843, %v837, 0
        %v848 = vsel %vm843, %v842, 0
        %850 = vmatpush.bf16.xpose.msra.mxu0 0
        %851 = vmatpush.bf16.xpose.msra.mxu0 0
        %852 = vmatpush.bf16.xpose.msra.mxu0 0
        %853 = vmatpush.bf16.xpose.msra.mxu0 0
        %854 = vmatpush.bf16.xpose.msra.mxu0 0
        %855 = vmatpush.bf16.xpose.msra.mxu0 0
        %856 = vmatpush.bf16.xpose.msra.mxu0 0
        %857 = vmatpush.bf16.xpose.msra.mxu0 %v848
        %858 = vmatmul.bf16.gmra.mxu0 %v845
        %v859 = vpop.f32.mrf.mxu0
        %v860 = vadd.f32 %v730, %v859
        %v861 = vpop.f32.mrf.mxu0
        %862 = vdwg.mxu0
        %v863 = vsel %vm843, %v860, -inf
        %864 = vmax.xlane.f32.xlu0 %v863
        %v865 = vpop.xlane.xlu0 %864
        %v866 = vsub.f32 %v860, %v865
        %v867 = vmul.f32 %v866, 1.442695
        %v868 = vpow.pop %v867
        %v869 = vsel %vm843, %v868, 0.0
        %870 = vadd.xlane.f32.xlu0 %v869
        %v871 = vpop.xlane.xlu0 %870
        %v872 = vrcp.pop %v871
        %v873 = vmul.f32 %v868, %v872
        %v874 = vpack.c.bf16 %v873, %v873
        %875 = vrot.lane.b32.xlu0 %v840, 64
        %v876 = vpop.permute.xlu0 %875
        %v878 = vsel %vm843, %v874, 0
        %vm880 = vcmask 1043456
        %v882 = vsel %vm880, %v876, 0
        %884 = vmatpush.bf16.msra.mxu0 0
        %885 = vmatpush.bf16.msra.mxu0 0
        %886 = vmatpush.bf16.msra.mxu0 0
        %887 = vmatpush.bf16.msra.mxu0 0
        %888 = vmatpush.bf16.msra.mxu0 0
        %889 = vmatpush.bf16.msra.mxu0 0
        %890 = vmatpush.bf16.msra.mxu0 0
        %891 = vmatpush.bf16.msra.mxu0 %v882
        %892 = vmatmul.bf16.gmra.mxu0 %v878
        %v893 = vpop.f32.mrf.mxu0
        %v894 = vadd.f32 0.0, %v893
        %v895 = vpop.f32.mrf.mxu0
        %896 = vdwg.mxu0
        %v897 = vpack.c.bf16 %v894, %v894
        %898 = vrot.lane.b32.xlu0 %v840, 120
        %v899 = vpop.permute.xlu0 %898
        %900 = vrot.lane.b32.xlu0 %v840, 88
        %v901 = vpop.permute.xlu0 %900
        %v903 = vsel %vm843, %v899, 0
        %v906 = vsel %vm843, %v901, 0
        %908 = vmatpush.bf16.xpose.msra.mxu0 0
        %909 = vmatpush.bf16.xpose.msra.mxu0 0
        %910 = vmatpush.bf16.xpose.msra.mxu0 0
        %911 = vmatpush.bf16.xpose.msra.mxu0 0
        %912 = vmatpush.bf16.xpose.msra.mxu0 0
        %913 = vmatpush.bf16.xpose.msra.mxu0 0
        %914 = vmatpush.bf16.xpose.msra.mxu0 0
        %915 = vmatpush.bf16.xpose.msra.mxu0 %v906
        %916 = vmatmul.bf16.gmra.mxu0 %v903
        %v917 = vpop.f32.mrf.mxu0
        %v918 = vadd.f32 %v730, %v917
        %v919 = vpop.f32.mrf.mxu0
        %920 = vdwg.mxu0
        %v921 = vsel %vm843, %v918, -inf
        %922 = vmax.xlane.f32.xlu0 %v921
        %v923 = vpop.xlane.xlu0 %922
        %v924 = vsub.f32 %v918, %v923
        %v925 = vmul.f32 %v924, 1.442695
        %v926 = vpow.pop %v925
        %v927 = vsel %vm843, %v926, 0.0
        %928 = vadd.xlane.f32.xlu0 %v927
        %v929 = vpop.xlane.xlu0 %928
        %v930 = vrcp.pop %v929
        %v931 = vmul.f32 %v926, %v930
        %v932 = vpack.c.bf16 %v931, %v931
        %933 = vrot.lane.b32.xlu0 %v840, 56
        %v934 = vpop.permute.xlu0 %933
        %v936 = vsel %vm843, %v932, 0
        %v939 = vsel %vm880, %v934, 0
        %941 = vmatpush.bf16.msra.mxu0 0
        %942 = vmatpush.bf16.msra.mxu0 0
        %943 = vmatpush.bf16.msra.mxu0 0
        %944 = vmatpush.bf16.msra.mxu0 0
        %945 = vmatpush.bf16.msra.mxu0 0
        %946 = vmatpush.bf16.msra.mxu0 0
        %947 = vmatpush.bf16.msra.mxu0 0
        %948 = vmatpush.bf16.msra.mxu0 %v939
        %949 = vmatmul.bf16.gmra.mxu0 %v936
        %v950 = vpop.f32.mrf.mxu0
        %v951 = vadd.f32 0.0, %v950
        %v952 = vpop.f32.mrf.mxu0
        %953 = vdwg.mxu0
        %v954 = vpack.c.bf16 %v951, %v951
        %v956 = vsel %vm843, %v954, 0
        %v959 = vsel %vm880, %v739, 0
        %961 = vmatpush.bf16.msra.mxu0 0
        %962 = vmatpush.bf16.msra.mxu0 0
        %963 = vmatpush.bf16.msra.mxu0 0
        %964 = vmatpush.bf16.msra.mxu0 0
        %965 = vmatpush.bf16.msra.mxu0 0
        %966 = vmatpush.bf16.msra.mxu0 0
        %967 = vmatpush.bf16.msra.mxu0 0
        %968 = vmatpush.bf16.msra.mxu0 %v959
        %969 = vmatmul.bf16.gmra.mxu0 %v956
        %v970 = vpop.f32.mrf.mxu0
        %v971 = vadd.f32 0.0, %v970
        %v972 = vpop.f32.mrf.mxu0
        %973 = vdwg.mxu0
        %v975 = vsel %vm843, %v897, 0
        %v978 = vsel %vm880, %v738, 0
        %980 = vmatpush.bf16.msra.mxu0 0
        %981 = vmatpush.bf16.msra.mxu0 0
        %982 = vmatpush.bf16.msra.mxu0 0
        %983 = vmatpush.bf16.msra.mxu0 0
        %984 = vmatpush.bf16.msra.mxu0 0
        %985 = vmatpush.bf16.msra.mxu0 0
        %986 = vmatpush.bf16.msra.mxu0 0
        %987 = vmatpush.bf16.msra.mxu0 %v978
        %988 = vmatmul.bf16.gmra.mxu0 %v975
        %v989 = vpop.f32.mrf.mxu0
        %v990 = vadd.f32 %v971, %v989
        %v991 = vpop.f32.mrf.mxu0
        %992 = vdwg.mxu0
        %993 = vrot.lane.b32.xlu0 %v840, 112
        %v994 = vpop.permute.xlu0 %993
        %995 = vrot.lane.b32.xlu0 %v840, 80
        %v996 = vpop.permute.xlu0 %995
        %v998 = vsel %vm843, %v994, 0
        %v1001 = vsel %vm843, %v996, 0
        %1003 = vmatpush.bf16.xpose.msra.mxu0 0
        %1004 = vmatpush.bf16.xpose.msra.mxu0 0
        %1005 = vmatpush.bf16.xpose.msra.mxu0 0
        %1006 = vmatpush.bf16.xpose.msra.mxu0 0
        %1007 = vmatpush.bf16.xpose.msra.mxu0 0
        %1008 = vmatpush.bf16.xpose.msra.mxu0 0
        %1009 = vmatpush.bf16.xpose.msra.mxu0 0
        %1010 = vmatpush.bf16.xpose.msra.mxu0 %v1001
        %1011 = vmatmul.bf16.gmra.mxu0 %v998
        %v1012 = vpop.f32.mrf.mxu0
        %v1013 = vadd.f32 %v730, %v1012
        %v1014 = vpop.f32.mrf.mxu0
        %1015 = vdwg.mxu0
        %v1016 = vsel %vm843, %v1013, -inf
        %1017 = vmax.xlane.f32.xlu0 %v1016
        %v1018 = vpop.xlane.xlu0 %1017
        %v1019 = vsub.f32 %v1013, %v1018
        %v1020 = vmul.f32 %v1019, 1.442695
        %v1021 = vpow.pop %v1020
        %v1022 = vsel %vm843, %v1021, 0.0
        %1023 = vadd.xlane.f32.xlu0 %v1022
        %v1024 = vpop.xlane.xlu0 %1023
        %v1025 = vrcp.pop %v1024
        %v1026 = vmul.f32 %v1021, %v1025
        %v1027 = vpack.c.bf16 %v1026, %v1026
        %1028 = vrot.lane.b32.xlu0 %v840, 48
        %v1029 = vpop.permute.xlu0 %1028
        %v1031 = vsel %vm843, %v1027, 0
        %v1034 = vsel %vm880, %v1029, 0
        %1036 = vmatpush.bf16.msra.mxu0 0
        %1037 = vmatpush.bf16.msra.mxu0 0
        %1038 = vmatpush.bf16.msra.mxu0 0
        %1039 = vmatpush.bf16.msra.mxu0 0
        %1040 = vmatpush.bf16.msra.mxu0 0
        %1041 = vmatpush.bf16.msra.mxu0 0
        %1042 = vmatpush.bf16.msra.mxu0 0
        %1043 = vmatpush.bf16.msra.mxu0 %v1034
        %1044 = vmatmul.bf16.gmra.mxu0 %v1031
        %v1045 = vpop.f32.mrf.mxu0
        %v1046 = vadd.f32 0.0, %v1045
        %v1047 = vpop.f32.mrf.mxu0
        %1048 = vdwg.mxu0
        %v1049 = vpack.c.bf16 %v1046, %v1046
        %v1051 = vsel %vm843, %v1049, 0
        %v1054 = vsel %vm880, %v740, 0
        %1056 = vmatpush.bf16.msra.mxu0 0
        %1057 = vmatpush.bf16.msra.mxu0 0
        %1058 = vmatpush.bf16.msra.mxu0 0
        %1059 = vmatpush.bf16.msra.mxu0 0
        %1060 = vmatpush.bf16.msra.mxu0 0
        %1061 = vmatpush.bf16.msra.mxu0 0
        %1062 = vmatpush.bf16.msra.mxu0 0
        %1063 = vmatpush.bf16.msra.mxu0 %v1054
        %1064 = vmatmul.bf16.gmra.mxu0 %v1051
        %v1065 = vpop.f32.mrf.mxu0
        %v1066 = vadd.f32 0.0, %v1065
        %v1067 = vpop.f32.mrf.mxu0
        %1068 = vdwg.mxu0
        %v1069 = vadd.f32 %v990, %v1066
        %1070 = vrot.lane.b32.xlu0 %v840, 104
        %v1071 = vpop.permute.xlu0 %1070
        %1072 = vrot.lane.b32.xlu0 %v840, 72
        %v1073 = vpop.permute.xlu0 %1072
        %v1075 = vsel %vm843, %v1071, 0
        %v1078 = vsel %vm843, %v1073, 0
        %1080 = vmatpush.bf16.xpose.msra.mxu0 0
        %1081 = vmatpush.bf16.xpose.msra.mxu0 0
        %1082 = vmatpush.bf16.xpose.msra.mxu0 0
        %1083 = vmatpush.bf16.xpose.msra.mxu0 0
        %1084 = vmatpush.bf16.xpose.msra.mxu0 0
        %1085 = vmatpush.bf16.xpose.msra.mxu0 0
        %1086 = vmatpush.bf16.xpose.msra.mxu0 0
        %1087 = vmatpush.bf16.xpose.msra.mxu0 %v1078
        %1088 = vmatmul.bf16.gmra.mxu0 %v1075
        %v1089 = vpop.f32.mrf.mxu0
        %v1090 = vadd.f32 %v730, %v1089
        %v1091 = vpop.f32.mrf.mxu0
        %1092 = vdwg.mxu0
        %v1093 = vsel %vm843, %v1090, -inf
        %1094 = vmax.xlane.f32.xlu0 %v1093
        %v1095 = vpop.xlane.xlu0 %1094
        %v1096 = vsub.f32 %v1090, %v1095
        %v1097 = vmul.f32 %v1096, 1.442695
        %v1098 = vpow.pop %v1097
        %v1099 = vsel %vm843, %v1098, 0.0
        %1100 = vadd.xlane.f32.xlu0 %v1099
        %v1101 = vpop.xlane.xlu0 %1100
        %v1102 = vrcp.pop %v1101
        %v1103 = vmul.f32 %v1098, %v1102
        %v1104 = vpack.c.bf16 %v1103, %v1103
        %1105 = vrot.lane.b32.xlu0 %v840, 40
        %v1106 = vpop.permute.xlu0 %1105
        %v1108 = vsel %vm843, %v1104, 0
        %v1111 = vsel %vm880, %v1106, 0
        %1113 = vmatpush.bf16.msra.mxu0 0
        %1114 = vmatpush.bf16.msra.mxu0 0
        %1115 = vmatpush.bf16.msra.mxu0 0
        %1116 = vmatpush.bf16.msra.mxu0 0
        %1117 = vmatpush.bf16.msra.mxu0 0
        %1118 = vmatpush.bf16.msra.mxu0 0
        %1119 = vmatpush.bf16.msra.mxu0 0
        %1120 = vmatpush.bf16.msra.mxu0 %v1111
        %1121 = vmatmul.bf16.gmra.mxu0 %v1108
        %v1122 = vpop.f32.mrf.mxu0
        %v1123 = vadd.f32 0.0, %v1122
        %v1124 = vpop.f32.mrf.mxu0
        %1125 = vdwg.mxu0
        %v1126 = vpack.c.bf16 %v1123, %v1123
        %v1128 = vsel %vm843, %v1126, 0
        %v1131 = vsel %vm880, %v741, 0
        %1133 = vmatpush.bf16.msra.mxu0 0
        %1134 = vmatpush.bf16.msra.mxu0 0
        %1135 = vmatpush.bf16.msra.mxu0 0
        %1136 = vmatpush.bf16.msra.mxu0 0
        %1137 = vmatpush.bf16.msra.mxu0 0
        %1138 = vmatpush.bf16.msra.mxu0 0
        %1139 = vmatpush.bf16.msra.mxu0 0
        %1140 = vmatpush.bf16.msra.mxu0 %v1131
        %1141 = vmatmul.bf16.gmra.mxu0 %v1128
        %v1142 = vpop.f32.mrf.mxu0
        %v1143 = vadd.f32 0.0, %v1142
        %v1144 = vpop.f32.mrf.mxu0
        %1145 = vdwg.mxu0
        %v1146 = vadd.f32 %v1069, %v1143
        %v1147 = vadd.f32 %v729, %v1146
        %v1149 = vperm.slane %v742, 0
        %v1151 = vadd.f32 %v1147, %v1149
        %v1152 = vsel %vm767, %v1151, 0.0
        %1153 = vadd.xlane.f32.xlu0 %v1152
        %v1154 = vpop.xlane.xlu0 %1153
        %v1155 = vmul.f32 %v1154, %v777
        %v1156 = vsub.f32 %v1151, %v1155
        %v1157 = vmul.f32 %v1156, %v1156
        %v1158 = vsel %vm767, %v1157, 0.0
        %1159 = vadd.xlane.f32.xlu0 %v1158
        %v1160 = vpop.xlane.xlu0 %1159
        %v1161 = vmul.f32 %v1160, %v777
        %v1162 = vadd.f32 %v1161, 1e-05
        %v1163 = vrsqrt.pop %v1162
        %v1164 = vmul.f32 %v1163, %v1162
        %v1165 = vmul.f32 %v1164, %v1163
        %v1166 = vmul.f32 0.5, %v1165
        %v1167 = vsub.f32 1.5, %v1166
        %v1168 = vmul.f32 %v1163, %v1167
        %vm1169 = vweird.f32 %v1162
        %vm1170 = vweird.f32 %v1163
        %vm1171 = vmor %vm1169, %vm1170
        %v1172 = vsel %vm1171, %v1163, %v1168
        %v1173 = vmul.f32 %v1156, %v1172
        %v1175 = vperm.slane %v743, 0
        %v1177 = vmul.f32 %v1173, %v1175
        %v1179 = vperm.slane %v744, 0
        %v1181 = vadd.f32 %v1177, %v1179
        %v1182 = vpack.c.bf16 %v1181, %v1181
        %v1184 = vperm.slane %v749, 0
        %v1190 = vunpack.c.l.b16 %v745
        %v1191 = vunpack.c.l.b16 %v746
        %v1192 = vunpack.c.l.b16 %v747
        %v1193 = vunpack.c.l.b16 %v748
        %v1194 = vpack.c.b16 %v1191, %v1190
        %v1195 = vpack.c.b16 %v1193, %v1192
        %v1199 = vsel %vm767, %v1182, 0
        %1201 = vmatpush.bf16.msra.mxu0 0
        %1202 = vmatpush.bf16.msra.mxu0 0
        %1203 = vmatpush.bf16.msra.mxu0 0
        %1204 = vmatpush.bf16.msra.mxu0 0
        %1205 = vmatpush.bf16.msra.mxu0 0
        %1206 = vmatpush.bf16.msra.mxu0 0
        %1207 = vmatpush.bf16.msra.mxu0 %v1195
        %1208 = vmatpush.bf16.msra.mxu0 %v1194
        %1209 = vmatmul.bf16.gmra.mxu0 %v1199
        %v1210 = vpop.f32.mrf.mxu0
        %v1211 = vadd.f32 %v1184, %v1210
        %v1212 = vpop.f32.mrf.mxu0
        %1213 = vdwg.mxu0
        %v1214 = vmul.f32 %v1211, 1.702
        %v1215 = vxor.u32 %v1214, 2147483648
        %v1216 = vmul.f32 %v1215, 1.442695
        %v1217 = vpow.pop %v1216
        %v1218 = vadd.f32 %v1217, 1.0
        %v1219 = vrcp.pop %v1218
        %v1220 = vmul.f32 %v1218, %v1219
        %v1221 = vsub.f32 1.0, %v1220
        %v1222 = vmul.f32 %v1219, %v1221
        %v1223 = vadd.f32 %v1219, %v1222
        %vm1224 = vweird.f32 %v1218
        %vm1225 = vweird.f32 %v1219
        %vm1226 = vmor %vm1224, %vm1225
        %v1227 = vsel %vm1226, %v1219, %v1223
        %v1228 = vand.u32 2147483647, %v1218
        %vm1229 = vcmp.eq.f32.partialorder %v1228, 8.507059e+37
        %v1230 = vand.u32 %v1218, 2147483648
        %v1231 = vor.u32 1.1754944e-38, %v1230
        %v1232 = vsel %vm1229, %v1231, %v1227
        %v1233 = vmul.f32 1.0, %v1232
        %v1234 = vmul.f32 %v1211, %v1233
        %v1235 = vpack.c.bf16 %v1234, %v1234
        %v1252 = vunpack.c.l.b16 %v750
        %v1253 = vunpack.c.l.b16 %v751
        %v1254 = vunpack.c.l.b16 %v752
        %v1255 = vunpack.c.l.b16 %v753
        %v1256 = vunpack.c.l.b16 %v754
        %v1257 = vunpack.c.l.b16 %v755
        %v1258 = vunpack.c.l.b16 %v756
        %v1259 = vunpack.c.l.b16 %v757
        %v1260 = vunpack.c.l.b16 %v758
        %v1261 = vunpack.c.l.b16 %v759
        %v1262 = vunpack.c.l.b16 %v760
        %v1263 = vunpack.c.l.b16 %v761
        %v1264 = vunpack.c.l.b16 %v762
        %v1265 = vunpack.c.l.b16 %v763
        %v1266 = vunpack.c.l.b16 %v764
        %v1267 = vunpack.c.l.b16 %v765
        %v1268 = vpack.c.b16 %v1253, %v1252
        %v1269 = vpack.c.b16 %v1255, %v1254
        %v1270 = vpack.c.b16 %v1257, %v1256
        %v1271 = vpack.c.b16 %v1259, %v1258
        %v1272 = vpack.c.b16 %v1261, %v1260
        %v1273 = vpack.c.b16 %v1263, %v1262
        %v1274 = vpack.c.b16 %v1265, %v1264
        %v1275 = vpack.c.b16 %v1267, %v1266
        %1284 = vmatpush.bf16.msra.mxu0 %v1275
        %1285 = vmatpush.bf16.msra.mxu0 %v1274
        %1286 = vmatpush.bf16.msra.mxu0 %v1273
        %1287 = vmatpush.bf16.msra.mxu0 %v1272
        %1288 = vmatpush.bf16.msra.mxu0 %v1271
        %1289 = vmatpush.bf16.msra.mxu0 %v1270
        %1290 = vmatpush.bf16.msra.mxu0 %v1269
        %1291 = vmatpush.bf16.msra.mxu0 %v1268
        %1292 = vmatmul.bf16.gmra.mxu0 %v1235
        %v1293 = vpop.f32.mrf.mxu0
        %v1294 = vadd.f32 0.0, %v1293
        %v1295 = vpop.f32.mrf.mxu0
        %1296 = vdwg.mxu0
        %v1297 = vadd.f32 %v1151, %v1294
        %v1299 = vperm.slane %v766, 0
        %v1301 = vadd.f32 %v1297, %v1299
        %1302 = vst.msk [vmem:[%s672] sm:$0xff] %vm767, %v1301
        %p1303 = scmp.eq.s32.totalorder %s35, 1
        // Predicated region
        $region89: #{tpu_custom_call.1} parent=83 // pred_check
          %p1304 = pneg %p1303
        $region90: #{tpu_custom_call.1} parent=83 // pred_check_branch
          %1306 = sbr.rel (%p1304) target = $region92
        $region91: #{tpu_custom_call.1} parent=83 // pred_region
          %v1307 = vld [vmem:[%s14] sm:$0x1]
          %v1308 = vld [vmem:[%s15] sm:$0x1]
          %v1309 = vsel %vm767, %v1301, 0.0
          %1310 = vadd.xlane.f32.xlu0 %v1309
          %v1311 = vpop.xlane.xlu0 %1310
          %v1312 = vmul.f32 %v1311, %v777
          %v1313 = vsub.f32 %v1301, %v1312
          %v1314 = vmul.f32 %v1313, %v1313
          %v1315 = vsel %vm767, %v1314, 0.0
          %1316 = vadd.xlane.f32.xlu0 %v1315
          %v1317 = vpop.xlane.xlu0 %1316
          %v1318 = vmul.f32 %v1317, %v777
          %v1319 = vadd.f32 %v1318, 1e-05
          %v1320 = vrsqrt.pop %v1319
          %v1321 = vmul.f32 %v1320, %v1319
          %v1322 = vmul.f32 %v1321, %v1320
          %v1323 = vmul.f32 0.5, %v1322
          %v1324 = vsub.f32 1.5, %v1323
          %v1325 = vmul.f32 %v1320, %v1324
          %vm1326 = vweird.f32 %v1319
          %vm1327 = vweird.f32 %v1320
          %vm1328 = vmor %vm1326, %vm1327
          %v1329 = vsel %vm1328, %v1320, %v1325
          %v1330 = vmul.f32 %v1313, %v1329
          %v1332 = vperm.slane %v1307, 0
          %v1334 = vmul.f32 %v1330, %v1332
          %v1336 = vperm.slane %v1308, 0
          %v1338 = vadd.f32 %v1334, %v1336
          %1339 = vst.msk [vmem:[%s672] sm:$0xff] %vm767, %v1338
        $region92: #{tpu_custom_call.1} parent=83 // pred_fallthru
          _
        %s1340 = sand.u32 %s451, 1
        %s1341 = scalar_lea.sflag [#allocation3], %s1340
        %s1342 = sand.u32 %s451, 1
        %s1343 = smul.addr %s1342, 8
        %s1344 = scalar_lea.vmem [#allocation2], %s1343
        // Predicated region
        $region93: #{tpu_custom_call.1} parent=83 // pred_check
          %p1345 = pneg %p461
        $region94: #{tpu_custom_call.1} parent=83 // pred_check_branch
          %1347 = sbr.rel (%p1345) target = $region96
        $region95: #{tpu_custom_call.1} parent=83 // pred_region
          %1349 = vsyncadd %s1341, 0
          %s1350 = smul.addr %s34, 8
          %s1351 = scalar_lea.hbm %s16, %s1350
          %s1353 = sshll.u32 %s1344, 4
          %s1354 = int_to_ptr.vmem [resolvable:$true] %s1353
          %s1355 = sshll.u32 %s1351, 4
          %s1356 = int_to_ptr.hbm [resolvable:$true] %s1355
          %1358 = dma.vmem_to_hbm [thread:$0]  %s1354, 128, %s1356, %s1341
        $region96: #{tpu_custom_call.1} parent=83 // pred_fallthru
          _
      $region84: #{tpu_custom_call.1} parent=5 // pred_fallthru
        _
      %p1359 = scmp.le.s32.totalorder 2, %s25
      // Predicated region
      $region97: #{tpu_custom_call.1} parent=5 // pred_check
        %p1360 = pneg %p1359
      $region98: #{tpu_custom_call.1} parent=5 // pred_check_branch
        %1362 = sbr.rel (%p1360) target = $region100
      $region99: #{tpu_custom_call.1} parent=5 // pred_region
        %s1363 = ssub.s32 %s25, 2
        // Predicated region
        $region101: #{tpu_custom_call.1} parent=99 // pred_check
          %p1364 = pneg %p467
        $region102: #{tpu_custom_call.1} parent=99 // pred_check_branch
          %1366 = sbr.rel (%p1364) target = $region104
        $region103: #{tpu_custom_call.1} parent=99 // pred_region
          %s1367 = sand.u32 %s452, 1
          %s1368 = scalar_lea.sflag [#allocation3], %s1367
          %s1369 = sand.u32 %s452, 1
          %s1370 = smul.addr %s1369, 8
          %s1371 = scalar_lea.vmem [#allocation2], %s1370
          %1373 = dma.done %s1368, 128
        $region104: #{tpu_custom_call.1} parent=99 // pred_fallthru
          _
      $region100: #{tpu_custom_call.1} parent=5 // pred_fallthru
        _
    $region6: #{tpu_custom_call.1} parent=1 // loop_footer
      %s29 = sadd.s32 1, %s25
    $region7: #{tpu_custom_call.1} parent=1 // loop_footer_branch
      %24 = sbr.rel target = $region3
    $region8: #{tpu_custom_call.1} parent=1 // loop_exit
      _
    %1374 = vsyncpa [#allocation3], 1
    %s1375 = scalar_lea.sflag [#allocation3], 1
    %1376 = vsyncpa %s1375, 1

</llo_original>
